<compile_context>
chip_gen: v5e
topology: v5e:2x2
jax: 0.10.0
libtpu: 0.0.40
codegen_flags: <defaults>
</compile_context>

<pallas_src>
import functools
import math

import jax
import jax.numpy as jnp
from jax.experimental import pallas as pl
from jax.experimental.pallas import tpu as pltpu

LN_EPS = 1e-12
ACT_DTYPE = jnp.bfloat16

# Large M tile -> fewer weight re-reads (the dominant HBM cost at BERT-base
# shapes); TN=1024 also cuts activation re-reads on the 768->3072 FFN GEMM.
TM, TN, TK = 1024, 1024, 512
# Raised above the 32 MiB (v7x/v6e) / 16 MiB (v5e) scoped defaults; all GEMM
# working sets at these tiles are <= ~13 MiB double-buffered, so 48 MiB leaves
# headroom even on v7x's 64 MiB physical VMEM.
VMEM_LIMIT_BYTES = 48 * 1024 * 1024


def _tile(dim, target, align=128):
    """Largest `align`-aligned tile <= target that divides dim (else full dim)."""
    if dim <= target:
        return dim
    t = (target // align) * align
    while t >= align:
        if dim % t == 0:
            return t
        t -= align
    # TODO(synk): pad M/N to a 128 multiple (or use pl.cdiv grids + in-kernel
    # masking) for awkward sizes; full-dim fallback is correct but can blow VMEM.
    return dim


# ---------------------------------------------------------------------------
# Elementwise helpers (run inside kernels, fp32)
# ---------------------------------------------------------------------------
_ERF_P = 0.3275911
_ERF_A = (0.254829592, -0.284496736, 1.421413741, -1.453152027, 1.061405429)


def _erf(x):
    # Abramowitz & Stegun 7.1.26: |error| <= 1.5e-7 -> effectively the exact
    # erf-GELU HF BERT uses, built only from exp (EUP) + VPU ops.
    ax = jnp.abs(x)
    t = 1.0 / (1.0 + _ERF_P * ax)
    a1, a2, a3, a4, a5 = _ERF_A
    poly = t * (a1 + t * (a2 + t * (a3 + t * (a4 + t * a5))))
    y = 1.0 - poly * jnp.exp(-ax * ax)
    return jnp.where(x < 0, -y, y)


def _apply_act(y, activation):
    if activation == "gelu":
        return 0.5 * y * (1.0 + _erf(y * (1.0 / math.sqrt(2.0))))
    if activation == "tanh":
        return jnp.tanh(y)
    return y


# ---------------------------------------------------------------------------
# Tiled linear (+ fused bias / activation)
# ---------------------------------------------------------------------------
def _linear_kernel(x_ref, w_ref, b_ref, o_ref, acc_ref, *, activation):
    @pl.when(pl.program_id(2) == 0)
    def _init():
        acc_ref[...] = jnp.zeros_like(acc_ref)

    acc_ref[...] += jnp.dot(x_ref[...], w_ref[...],
                            preferred_element_type=jnp.float32)

    @pl.when(pl.program_id(2) == pl.num_programs(2) - 1)
    def _finalize():
        y = acc_ref[...] + b_ref[...]
        o_ref[...] = _apply_act(y, activation).astype(o_ref.dtype)


def linear(x, w, b, activation=None, out_dtype=ACT_DTYPE):
    """y = act(x @ w + b); bf16 MXU inputs, fp32 accumulation, tiled (M, N, K)."""
    M, K = x.shape
    N = w.shape[1]
    tm, tn, tk = _tile(M, TM), _tile(N, TN), _tile(K, TK)
    # TODO(synk): if profiling on v5e still shows exposed weight DMA, add
    # pipeline_mode=pl.Buffered(3) on the weight BlockSpec.
    return pl.pallas_call(
        functools.partial(_linear_kernel, activation=activation),
        out_shape=jax.ShapeDtypeStruct((M, N), out_dtype),
        grid=(M // tm, N // tn, K // tk),
        in_specs=[
            pl.BlockSpec((tm, tk), lambda i, j, k: (i, k)),
            pl.BlockSpec((tk, tn), lambda i, j, k: (k, j)),
            pl.BlockSpec((1, tn), lambda i, j, k: (0, j)),
        ],
        out_specs=pl.BlockSpec((tm, tn), lambda i, j, k: (i, j)),
        scratch_shapes=[pltpu.VMEM((tm, tn), jnp.float32)],
        compiler_params=pltpu.CompilerParams(
            dimension_semantics=("parallel", "parallel", "arbitrary"),
            vmem_limit_bytes=VMEM_LIMIT_BYTES),
        cost_estimate=pl.CostEstimate(
            flops=2 * M * N * K,
            transcendentals=M * N if activation else 0,
            bytes_accessed=2 * (M * K + K * N) + M * N * jnp.dtype(out_dtype).itemsize),
    )(x.astype(ACT_DTYPE), w.astype(ACT_DTYPE),
      b.reshape(1, N).astype(jnp.float32))


# ---------------------------------------------------------------------------
# Tiled linear with fused residual add + LayerNorm epilogue (BERT eps=1e-12)
# ---------------------------------------------------------------------------
def _linear_res_ln_kernel(x_ref, w_ref, b_ref, r_ref, g_ref, bb_ref, o_ref, acc_ref):
    @pl.when(pl.program_id(1) == 0)
    def _init():
        acc_ref[...] = jnp.zeros_like(acc_ref)

    acc_ref[...] += jnp.dot(x_ref[...], w_ref[...],
                            preferred_element_type=jnp.float32)

    @pl.when(pl.program_id(1) == pl.num_programs(1) - 1)
    def _finalize():
        y = acc_ref[...] + b_ref[...] + r_ref[...].astype(jnp.float32)
        mu = jnp.mean(y, axis=-1, keepdims=True)
        var = jnp.mean((y - mu) ** 2, axis=-1, keepdims=True)
        inv = jax.lax.rsqrt(var + LN_EPS)
        o_ref[...] = ((y - mu) * inv * g_ref[...] + bb_ref[...]).astype(o_ref.dtype)


def linear_residual_layernorm(x, w, b, residual, gamma, beta, out_dtype=ACT_DTYPE):
    """LayerNorm(x @ w + b + residual); residual/LN fused into the GEMM epilogue.
    Output block spans the full hidden dim so the LN reduction stays in-tile."""
    M, K = x.shape
    N = w.shape[1]
    tm, tk = _tile(M, TM), _tile(K, TK)
    return pl.pallas_call(
        _linear_res_ln_kernel,
        out_shape=jax.ShapeDtypeStruct((M, N), out_dtype),
        grid=(M // tm, K // tk),
        in_specs=[
            pl.BlockSpec((tm, tk), lambda i, k: (i, k)),
            pl.BlockSpec((tk, N), lambda i, k: (k, 0)),
            pl.BlockSpec((1, N), lambda i, k: (0, 0)),
            pl.BlockSpec((tm, N), lambda i, k: (i, 0)),
            pl.BlockSpec((1, N), lambda i, k: (0, 0)),
            pl.BlockSpec((1, N), lambda i, k: (0, 0)),
        ],
        out_specs=pl.BlockSpec((tm, N), lambda i, k: (i, 0)),
        scratch_shapes=[pltpu.VMEM((tm, N), jnp.float32)],
        compiler_params=pltpu.CompilerParams(
            dimension_semantics=("parallel", "arbitrary"),
            vmem_limit_bytes=VMEM_LIMIT_BYTES),
        cost_estimate=pl.CostEstimate(
            flops=2 * M * N * K,
            transcendentals=M,
            bytes_accessed=2 * (M * K + K * N + M * N)
                           + M * N * jnp.dtype(out_dtype).itemsize),
    )(x.astype(ACT_DTYPE), w.astype(ACT_DTYPE),
      b.reshape(1, N).astype(jnp.float32), residual.astype(ACT_DTYPE),
      gamma.reshape(1, N).astype(jnp.float32),
      beta.reshape(1, N).astype(jnp.float32))


# ---------------------------------------------------------------------------
# Standalone LayerNorm (embeddings only), row-tiled
# ---------------------------------------------------------------------------
def _layernorm_kernel(x_ref, g_ref, b_ref, o_ref):
    x = x_ref[...].astype(jnp.float32)
    mu = jnp.mean(x, axis=-1, keepdims=True)
    var = jnp.mean((x - mu) ** 2, axis=-1, keepdims=True)
    inv = jax.lax.rsqrt(var + LN_EPS)
    o_ref[...] = ((x - mu) * inv * g_ref[...] + b_ref[...]).astype(o_ref.dtype)


def layernorm(x, gamma, beta, out_dtype=ACT_DTYPE):
    M, H = x.shape
    tm = _tile(M, TM)
    return pl.pallas_call(
        _layernorm_kernel,
        out_shape=jax.ShapeDtypeStruct((M, H), out_dtype),
        grid=(M // tm,),
        in_specs=[pl.BlockSpec((tm, H), lambda i: (i, 0)),
                  pl.BlockSpec((1, H), lambda i: (0, 0)),
                  pl.BlockSpec((1, H), lambda i: (0, 0))],
        out_specs=pl.BlockSpec((tm, H), lambda i: (i, 0)),
        compiler_params=pltpu.CompilerParams(dimension_semantics=("parallel",)),
    )(x, gamma.reshape(1, H).astype(jnp.float32),
      beta.reshape(1, H).astype(jnp.float32))


# ---------------------------------------------------------------------------
# Attention: one batch per grid step, in-kernel head loop, lane-dense output
# ---------------------------------------------------------------------------
def _attention_kernel(mask_ref, qkv_ref, o_ref, *, num_heads, head_dim, scale):
    H = num_heads * head_dim
    mask = mask_ref[0].astype(jnp.float32)                 # (1, S), bcast over rows
    # Statically-unrolled head loop: q/k/v are static lane slices of the fused
    # (S, 3H) QKV block at offsets h*Dh / H+h*Dh / 2H+h*Dh (no XLA transposes).
    # TODO(synk): on v6e/v7x batch 2-4 heads per QK^T/PV matmul so the
    # contraction/output width reaches 128-256 lanes (2x256^2 MXU occupancy).
    for h in range(num_heads):
        lo = h * head_dim
        qh = qkv_ref[0, :, lo:lo + head_dim]               # (S, Dh) bf16
        kh = qkv_ref[0, :, H + lo:H + lo + head_dim]
        vh = qkv_ref[0, :, 2 * H + lo:2 * H + lo + head_dim]
        # QK^T via dot_general contracting the last dims of both operands: the
        # MXU consumes K as the stationary operand, no in-kernel transpose.
        s = jax.lax.dot_general(qh, kh, (((1,), (1,)), ((), ())),
                                preferred_element_type=jnp.float32)
        s = s * scale + mask
        s = s - jnp.max(s, axis=-1, keepdims=True)
        p = jnp.exp(s)
        p = p * pl.reciprocal(jnp.sum(p, axis=-1, keepdims=True), approx=True)
        ctx = jnp.dot(p.astype(vh.dtype), vh, preferred_element_type=jnp.float32)
        o_ref[0, :, lo:lo + head_dim] = ctx.astype(o_ref.dtype)


def attention(qkv, add_mask, num_heads, scale):
    """softmax(q k^T * scale + mask) v per head, fused-QKV input (B, S, 3H).

    grid=(B,): each step DMAs one batch's QKV block once (instead of once per
    head) and writes a lane-dense (1, S, H) context block; the mask stays
    (B, 1, S) and is broadcast in-kernel.
    # TODO(synk): for S >> 512 switch to a flash-style kv-tiled online softmax.
    """
    B, S, H3 = qkv.shape
    H = H3 // 3
    return pl.pallas_call(
        functools.partial(_attention_kernel, num_heads=num_heads,
                          head_dim=H // num_heads, scale=scale),
        out_shape=jax.ShapeDtypeStruct((B, S, H), ACT_DTYPE),
        grid=(B,),
        in_specs=[pl.BlockSpec((1, 1, S), lambda b: (b, 0, 0)),
                  pl.BlockSpec((1, S, H3), lambda b: (b, 0, 0))],
        out_specs=pl.BlockSpec((1, S, H), lambda b: (b, 0, 0)),
        compiler_params=pltpu.CompilerParams(
            dimension_semantics=("parallel",)),
    )(add_mask, qkv)


# ---------------------------------------------------------------------------
# Parameters (deterministic synthetic init, BERT-like shapes)
# ---------------------------------------------------------------------------
def init_params(key, *, vocab, hidden, max_pos, type_vocab, num_layers,
                intermediate, num_labels):
    n_rand = 3 + 6 * num_layers + 2
    keys = iter(jax.random.split(key, n_rand))
    nrm = lambda k, s: 0.02 * jax.random.normal(k, s, dtype=jnp.float32)
    wt = lambda k, s: nrm(k, s).astype(ACT_DTYPE)        # MXU weights stored bf16

    params = {
        "word_emb": nrm(next(keys), (vocab, hidden)),
        "pos_emb": nrm(next(keys), (max_pos, hidden)),
        "type_emb": nrm(next(keys), (type_vocab, hidden)),
        "emb_ln_g": jnp.ones((hidden,), jnp.float32),
        "emb_ln_b": jnp.zeros((hidden,), jnp.float32),
        "layers": [],
    }
    for _ in range(num_layers):
        wq = wt(next(keys), (hidden, hidden))
        wk = wt(next(keys), (hidden, hidden))
        wv = wt(next(keys), (hidden, hidden))
        params["layers"].append({
            "w_qkv": jnp.concatenate([wq, wk, wv], axis=1),          # [H, 3H]
            "b_qkv": jnp.zeros((3 * hidden,), jnp.float32),
            "wo": wt(next(keys), (hidden, hidden)),
            "bo": jnp.zeros((hidden,), jnp.float32),
            "ln1_g": jnp.ones((hidden,), jnp.float32),
            "ln1_b": jnp.zeros((hidden,), jnp.float32),
            "wi": wt(next(keys), (hidden, intermediate)),
            "bi": jnp.zeros((intermediate,), jnp.float32),
            "wf": wt(next(keys), (intermediate, hidden)),
            "bf": jnp.zeros((hidden,), jnp.float32),
            "ln2_g": jnp.ones((hidden,), jnp.float32),
            "ln2_b": jnp.zeros((hidden,), jnp.float32),
        })
    params["wp"] = wt(next(keys), (hidden, hidden))
    params["bp"] = jnp.zeros((hidden,), jnp.float32)
    params["wc"] = nrm(next(keys), (hidden, num_labels))
    params["bc"] = jnp.zeros((num_labels,), jnp.float32)
    return params


# ---------------------------------------------------------------------------
# Forward pass: (loss, logits), mirroring BertForSequenceClassification
# ---------------------------------------------------------------------------
def bert_classifier_forward(params, input_ids, attention_mask, token_type_ids,
                            labels, *, num_heads):
    B, S = input_ids.shape
    H = params["word_emb"].shape[1]
    Dh = H // num_heads

    # Embeddings (gathers = glue) + LayerNorm kernel
    pos_ids = jnp.arange(S)
    emb = (params["word_emb"][input_ids]
           + params["pos_emb"][pos_ids][None, :, :]
           + params["type_emb"][token_type_ids]).astype(jnp.float32)
    x = layernorm(emb.reshape(B * S, H), params["emb_ln_g"], params["emb_ln_b"])

    # HF-style extended additive mask kept at (B, 1, S); broadcast in-kernel.
    add_mask = ((1.0 - attention_mask.astype(jnp.float32)) * -10000.0).reshape(B, 1, S)
    scale = 1.0 / math.sqrt(Dh)

    for lyr in params["layers"]:
        # Fused QKV projection: one [H, 3H] GEMM; its (B*S, 3H) output reshapes
        # for free to (B, S, 3H) — no XLA transposes anywhere in the layer.
        qkv = linear(x, lyr["w_qkv"], lyr["b_qkv"])                   # bf16
        ctx = attention(qkv.reshape(B, S, 3 * H), add_mask, num_heads, scale)
        ctx = ctx.reshape(B * S, H)                                   # free view
        # Output projection with residual add + LayerNorm fused into the epilogue.
        attn_out = linear_residual_layernorm(ctx, lyr["wo"], lyr["bo"], x,
                                             lyr["ln1_g"], lyr["ln1_b"])
        inter = linear(attn_out, lyr["wi"], lyr["bi"], activation="gelu")
        x = linear_residual_layernorm(inter, lyr["wf"], lyr["bf"], attn_out,
                                      lyr["ln2_g"], lyr["ln2_b"])

    # Pooler (tanh dense on [CLS]) — still a Pallas GEMM, fp32 output.
    cls = x.reshape(B, S, H)[:, 0, :]
    pooled = linear(cls, params["wp"], params["bp"], activation="tanh",
                    out_dtype=jnp.float32)

    # Classifier + cross-entropy: tiny (num_labels=2 lanes) — plain JAX per perf
    # review (a sub-128-lane Pallas output is pure launch/DMA overhead).
    logits = pooled @ params["wc"].astype(jnp.float32) + params["bc"]
    lse = jax.scipy.special.logsumexp(logits, axis=-1)
    nll = lse - jnp.take_along_axis(logits, labels[:, None], axis=-1)[:, 0]
    loss = jnp.mean(nll)
    return loss, logits


if __name__ == "__main__":
    # Small BERT-like config
    VOCAB, HIDDEN, MAX_POS, TYPE_VOCAB = 100, 32, 16, 2
    NUM_LAYERS, NUM_HEADS, INTERMEDIATE, NUM_LABELS = 2, 4, 64, 2
    B, S = 2, 8

    key = jax.random.PRNGKey(0)
    pkey, ikey, lkey = jax.random.split(key, 3)
    params = init_params(pkey, vocab=VOCAB, hidden=HIDDEN, max_pos=MAX_POS,
                         type_vocab=TYPE_VOCAB, num_layers=NUM_LAYERS,
                         intermediate=INTERMEDIATE, num_labels=NUM_LABELS)

    input_ids = jax.random.randint(ikey, (B, S), 0, VOCAB, dtype=jnp.int32)
    attention_mask = jnp.ones((B, S), jnp.int32)
    token_type_ids = jnp.zeros((B, S), jnp.int32)
    labels = jax.random.randint(lkey, (B,), 0, NUM_LABELS, dtype=jnp.int32)

    fwd = jax.jit(functools.partial(bert_classifier_forward, num_heads=NUM_HEADS))
    loss, logits = fwd(params, input_ids, attention_mask, token_type_ids, labels)
    jax.block_until_ready((loss, logits))
    assert logits.shape == (B, NUM_LABELS) and loss.shape == ()
    print("KERNEL_OK")
</pallas_src>

<mosaic_0001>
module attributes {stable_mosaic.version = 11 : i64} {
  func.func @_layernorm_kernel(%arg0: i32, %arg1: memref<16x32xf32, #tpu.memory_space<vmem>>, %arg2: memref<1x32xf32, #tpu.memory_space<vmem>>, %arg3: memref<1x32xf32, #tpu.memory_space<vmem>>, %arg4: memref<16x32xbf16, #tpu.memory_space<vmem>>) attributes {dimension_semantics = [#tpu.dimension_semantics<parallel>], iteration_bounds = array<i64: 1>, scalar_prefetch = 0 : i64, scratch_operands = 0 : i64, tpu.core_type = #tpu.core_type<tc>, window_params = [{transform_indices = @transform_0, window_bounds = array<i64: 16, 32>}, {pipeline_mode = #tpu.pipeline_mode<synchronous>, transform_indices = @transform_1, window_bounds = array<i64: 1, 32>}, {pipeline_mode = #tpu.pipeline_mode<synchronous>, transform_indices = @transform_2, window_bounds = array<i64: 1, 32>}, {transform_indices = @transform_3, window_bounds = array<i64: 16, 32>}]} {
    %c0 = arith.constant 0 : index
    %c0_0 = arith.constant 0 : index
    %0 = vector.load %arg1[%c0, %c0_0] : memref<16x32xf32, #tpu.memory_space<vmem>>, vector<16x32xf32>
    %cst = arith.constant dense<0.000000e+00> : vector<16xf32>
    %1 = vector.multi_reduction <add>, %0, %cst [1] : vector<16x32xf32> to vector<16xf32>
    %2 = vector.shape_cast %1 : vector<16xf32> to vector<16x1xf32>
    %cst_1 = arith.constant 3.200000e+01 : f32
    %3 = vector.broadcast %cst_1 : f32 to vector<16x1xf32>
    %4 = arith.divf %2, %3 : vector<16x1xf32>
    %5 = vector.broadcast %4 : vector<16x1xf32> to vector<16x32xf32>
    %6 = arith.subf %0, %5 : vector<16x32xf32>
    %7 = arith.mulf %6, %6 : vector<16x32xf32>
    %cst_2 = arith.constant dense<0.000000e+00> : vector<16xf32>
    %8 = vector.multi_reduction <add>, %7, %cst_2 [1] : vector<16x32xf32> to vector<16xf32>
    %9 = vector.shape_cast %8 : vector<16xf32> to vector<16x1xf32>
    %cst_3 = arith.constant 3.200000e+01 : f32
    %10 = vector.broadcast %cst_3 : f32 to vector<16x1xf32>
    %11 = arith.divf %9, %10 : vector<16x1xf32>
    %cst_4 = arith.constant 9.99999996E-13 : f32
    %12 = vector.broadcast %cst_4 : f32 to vector<16x1xf32>
    %13 = arith.addf %11, %12 : vector<16x1xf32>
    %14 = math.rsqrt %13 : vector<16x1xf32>
    %15 = vector.broadcast %4 : vector<16x1xf32> to vector<16x32xf32>
    %16 = arith.subf %0, %15 : vector<16x32xf32>
    %17 = vector.broadcast %14 : vector<16x1xf32> to vector<16x32xf32>
    %18 = arith.mulf %16, %17 : vector<16x32xf32>
    %c0_5 = arith.constant 0 : index
    %c0_6 = arith.constant 0 : index
    %19 = vector.load %arg2[%c0_5, %c0_6] : memref<1x32xf32, #tpu.memory_space<vmem>>, vector<1x32xf32>
    %20 = vector.broadcast %19 : vector<1x32xf32> to vector<16x32xf32>
    %21 = arith.mulf %18, %20 : vector<16x32xf32>
    %c0_7 = arith.constant 0 : index
    %c0_8 = arith.constant 0 : index
    %22 = vector.load %arg3[%c0_7, %c0_8] : memref<1x32xf32, #tpu.memory_space<vmem>>, vector<1x32xf32>
    %23 = vector.broadcast %22 : vector<1x32xf32> to vector<16x32xf32>
    %24 = arith.addf %21, %23 : vector<16x32xf32>
    %25 = arith.truncf %24 : vector<16x32xf32> to vector<16x32xbf16>
    %c0_9 = arith.constant 0 : index
    %c0_10 = arith.constant 0 : index
    %26 = vector.load %arg4[%c0_9, %c0_10] : memref<16x32xbf16, #tpu.memory_space<vmem>>, vector<16x32xbf16>
    tpu.vector_store %arg4[%c0_9, %c0_10], %25 {strides = array<i32>} : memref<16x32xbf16, #tpu.memory_space<vmem>>, vector<16x32xbf16>,
    return
  }
  func.func @transform_0(%arg0: i32) -> (i32, i32) {
    %c0_i32 = arith.constant 0 : i32
    %c0_i32_0 = arith.constant 0 : i32
    return %arg0, %c0_i32 : i32, i32
  }
  func.func @transform_1(%arg0: i32) -> (i32, i32) {
    %c0_i32 = arith.constant 0 : i32
    %c0_i32_0 = arith.constant 0 : i32
    %c0_i32_1 = arith.constant 0 : i32
    return %c0_i32, %c0_i32_0 : i32, i32
  }
  func.func @transform_2(%arg0: i32) -> (i32, i32) {
    %c0_i32 = arith.constant 0 : i32
    %c0_i32_0 = arith.constant 0 : i32
    %c0_i32_1 = arith.constant 0 : i32
    return %c0_i32, %c0_i32_0 : i32, i32
  }
  func.func @transform_3(%arg0: i32) -> (i32, i32) {
    %c0_i32 = arith.constant 0 : i32
    %c0_i32_0 = arith.constant 0 : i32
    return %arg0, %c0_i32 : i32, i32
  }
}

module attributes {stable_mosaic.version = 11 : i64} {
  func.func @_linear_kernel(%arg0: i32, %arg1: i32, %arg2: i32, %arg3: memref<16x32xbf16, #tpu.memory_space<vmem>>, %arg4: memref<32x96xbf16, #tpu.memory_space<vmem>>, %arg5: memref<1x96xf32, #tpu.memory_space<vmem>>, %arg6: memref<16x96xbf16, #tpu.memory_space<vmem>>, %arg7: memref<16x96xf32, #tpu.memory_space<vmem>>) attributes {dimension_semantics = [#tpu.dimension_semantics<parallel>, #tpu.dimension_semantics<parallel>, #tpu.dimension_semantics<arbitrary>], iteration_bounds = array<i64: 1, 1, 1>, scalar_prefetch = 0 : i64, scratch_operands = 1 : i64, tpu.core_type = #tpu.core_type<tc>, window_params = [{transform_indices = @transform_0, window_bounds = array<i64: 16, 32>}, {transform_indices = @transform_1, window_bounds = array<i64: 32, 96>}, {transform_indices = @transform_2, window_bounds = array<i64: 1, 96>}, {transform_indices = @transform_3, window_bounds = array<i64: 16, 96>}]} {
    %c0_i32 = arith.constant 0 : i32
    %0 = arith.cmpi eq, %arg2, %c0_i32 : i32
    %1 = arith.extui %0 : i1 to i32
    %c0_i32_0 = arith.constant 0 : i32
    %2 = arith.cmpi ne, %1, %c0_i32_0 : i32
    scf.if %2 {
      %cst_10 = arith.constant 0.000000e+00 : f32
      %12 = vector.broadcast %cst_10 : f32 to vector<16x96xf32>
      %c0_11 = arith.constant 0 : index
      %c0_12 = arith.constant 0 : index
      %13 = vector.load %arg7[%c0_11, %c0_12] : memref<16x96xf32, #tpu.memory_space<vmem>>, vector<16x96xf32>
      tpu.vector_store %arg7[%c0_11, %c0_12], %12 {strides = array<i32>} : memref<16x96xf32, #tpu.memory_space<vmem>>, vector<16x96xf32>,
    } else {
    }
    %c0 = arith.constant 0 : index
    %c0_1 = arith.constant 0 : index
    %3 = vector.load %arg7[%c0, %c0_1] : memref<16x96xf32, #tpu.memory_space<vmem>>, vector<16x96xf32>
    %c0_2 = arith.constant 0 : index
    %c0_3 = arith.constant 0 : index
    %4 = vector.load %arg3[%c0_2, %c0_3] : memref<16x32xbf16, #tpu.memory_space<vmem>>, vector<16x32xbf16>
    %c0_4 = arith.constant 0 : index
    %c0_5 = arith.constant 0 : index
    %5 = vector.load %arg4[%c0_4, %c0_5] : memref<32x96xbf16, #tpu.memory_space<vmem>>, vector<32x96xbf16>
    %cst = arith.constant dense<0.000000e+00> : vector<16x96xf32>
    %6 = tpu.matmul %4, %5, %cst {dimension_numbers = #tpu.dot_dimension_numbers<[1], [0], [0], [1], [0, 0, 1, 1], [], []>} : vector<16x32xbf16>, vector<32x96xbf16>, vector<16x96xf32> -> vector<16x96xf32>
    %7 = arith.addf %3, %6 : vector<16x96xf32>
    %c0_6 = arith.constant 0 : index
    %c0_7 = arith.constant 0 : index
    %8 = vector.load %arg7[%c0_6, %c0_7] : memref<16x96xf32, #tpu.memory_space<vmem>>, vector<16x96xf32>
    tpu.vector_store %arg7[%c0_6, %c0_7], %7 {strides = array<i32>} : memref<16x96xf32, #tpu.memory_space<vmem>>, vector<16x96xf32>,
    %c0_i32_8 = arith.constant 0 : i32
    %9 = arith.cmpi eq, %arg2, %c0_i32_8 : i32
    %10 = arith.extui %9 : i1 to i32
    %c0_i32_9 = arith.constant 0 : i32
    %11 = arith.cmpi ne, %10, %c0_i32_9 : i32
    scf.if %11 {
      %c0_10 = arith.constant 0 : index
      %c0_11 = arith.constant 0 : index
      %12 = vector.load %arg7[%c0_10, %c0_11] : memref<16x96xf32, #tpu.memory_space<vmem>>, vector<16x96xf32>
      %c0_12 = arith.constant 0 : index
      %c0_13 = arith.constant 0 : index
      %13 = vector.load %arg5[%c0_12, %c0_13] : memref<1x96xf32, #tpu.memory_space<vmem>>, vector<1x96xf32>
      %14 = vector.broadcast %13 : vector<1x96xf32> to vector<16x96xf32>
      %15 = arith.addf %12, %14 : vector<16x96xf32>
      %16 = arith.truncf %15 : vector<16x96xf32> to vector<16x96xbf16>
      %c0_14 = arith.constant 0 : index
      %c0_15 = arith.constant 0 : index
      %17 = vector.load %arg6[%c0_14, %c0_15] : memref<16x96xbf16, #tpu.memory_space<vmem>>, vector<16x96xbf16>
      tpu.vector_store %arg6[%c0_14, %c0_15], %16 {strides = array<i32>} : memref<16x96xbf16, #tpu.memory_space<vmem>>, vector<16x96xbf16>,
    } else {
    }
    return
  }
  func.func @transform_0(%arg0: i32, %arg1: i32, %arg2: i32) -> (i32, i32) {
    %c0_i32 = arith.constant 0 : i32
    return %arg0, %arg2 : i32, i32
  }
  func.func @transform_1(%arg0: i32, %arg1: i32, %arg2: i32) -> (i32, i32) {
    %c0_i32 = arith.constant 0 : i32
    return %arg2, %arg1 : i32, i32
  }
  func.func @transform_2(%arg0: i32, %arg1: i32, %arg2: i32) -> (i32, i32) {
    %c0_i32 = arith.constant 0 : i32
    %c0_i32_0 = arith.constant 0 : i32
    return %c0_i32, %arg1 : i32, i32
  }
  func.func @transform_3(%arg0: i32, %arg1: i32, %arg2: i32) -> (i32, i32) {
    %c0_i32 = arith.constant 0 : i32
    return %arg0, %arg1 : i32, i32
  }
}

module attributes {stable_mosaic.version = 11 : i64} {
  func.func @_linear_res_ln_kernel(%arg0: i32, %arg1: i32, %arg2: memref<16x32xbf16, #tpu.memory_space<vmem>>, %arg3: memref<32x32xbf16, #tpu.memory_space<vmem>>, %arg4: memref<1x32xf32, #tpu.memory_space<vmem>>, %arg5: memref<16x32xbf16, #tpu.memory_space<vmem>>, %arg6: memref<1x32xf32, #tpu.memory_space<vmem>>, %arg7: memref<1x32xf32, #tpu.memory_space<vmem>>, %arg8: memref<16x32xbf16, #tpu.memory_space<vmem>>, %arg9: memref<16x32xf32, #tpu.memory_space<vmem>>) attributes {dimension_semantics = [#tpu.dimension_semantics<parallel>, #tpu.dimension_semantics<arbitrary>], iteration_bounds = array<i64: 1, 1>, scalar_prefetch = 0 : i64, scratch_operands = 1 : i64, tpu.core_type = #tpu.core_type<tc>, window_params = [{transform_indices = @transform_0, window_bounds = array<i64: 16, 32>}, {transform_indices = @transform_1, window_bounds = array<i64: 32, 32>}, {pipeline_mode = #tpu.pipeline_mode<synchronous>, transform_indices = @transform_2, window_bounds = array<i64: 1, 32>}, {transform_indices = @transform_3, window_bounds = array<i64: 16, 32>}, {pipeline_mode = #tpu.pipeline_mode<synchronous>, transform_indices = @transform_4, window_bounds = array<i64: 1, 32>}, {pipeline_mode = #tpu.pipeline_mode<synchronous>, transform_indices = @transform_5, window_bounds = array<i64: 1, 32>}, {transform_indices = @transform_6, window_bounds = array<i64: 16, 32>}]} {
    %c0_i32 = arith.constant 0 : i32
    %0 = arith.cmpi eq, %arg1, %c0_i32 : i32
    %1 = arith.extui %0 : i1 to i32
    %c0_i32_0 = arith.constant 0 : i32
    %2 = arith.cmpi ne, %1, %c0_i32_0 : i32
    scf.if %2 {
      %cst_10 = arith.constant 0.000000e+00 : f32
      %12 = vector.broadcast %cst_10 : f32 to vector<16x32xf32>
      %c0_11 = arith.constant 0 : index
      %c0_12 = arith.constant 0 : index
      %13 = vector.load %arg9[%c0_11, %c0_12] : memref<16x32xf32, #tpu.memory_space<vmem>>, vector<16x32xf32>
      tpu.vector_store %arg9[%c0_11, %c0_12], %12 {strides = array<i32>} : memref<16x32xf32, #tpu.memory_space<vmem>>, vector<16x32xf32>,
    } else {
    }
    %c0 = arith.constant 0 : index
    %c0_1 = arith.constant 0 : index
    %3 = vector.load %arg9[%c0, %c0_1] : memref<16x32xf32, #tpu.memory_space<vmem>>, vector<16x32xf32>
    %c0_2 = arith.constant 0 : index
    %c0_3 = arith.constant 0 : index
    %4 = vector.load %arg2[%c0_2, %c0_3] : memref<16x32xbf16, #tpu.memory_space<vmem>>, vector<16x32xbf16>
    %c0_4 = arith.constant 0 : index
    %c0_5 = arith.constant 0 : index
    %5 = vector.load %arg3[%c0_4, %c0_5] : memref<32x32xbf16, #tpu.memory_space<vmem>>, vector<32x32xbf16>
    %cst = arith.constant dense<0.000000e+00> : vector<16x32xf32>
    %6 = tpu.matmul %4, %5, %cst {dimension_numbers = #tpu.dot_dimension_numbers<[1], [0], [0], [1], [0, 0, 1, 1], [], []>} : vector<16x32xbf16>, vector<32x32xbf16>, vector<16x32xf32> -> vector<16x32xf32>
    %7 = arith.addf %3, %6 : vector<16x32xf32>
    %c0_6 = arith.constant 0 : index
    %c0_7 = arith.constant 0 : index
    %8 = vector.load %arg9[%c0_6, %c0_7] : memref<16x32xf32, #tpu.memory_space<vmem>>, vector<16x32xf32>
    tpu.vector_store %arg9[%c0_6, %c0_7], %7 {strides = array<i32>} : memref<16x32xf32, #tpu.memory_space<vmem>>, vector<16x32xf32>,
    %c0_i32_8 = arith.constant 0 : i32
    %9 = arith.cmpi eq, %arg1, %c0_i32_8 : i32
    %10 = arith.extui %9 : i1 to i32
    %c0_i32_9 = arith.constant 0 : i32
    %11 = arith.cmpi ne, %10, %c0_i32_9 : i32
    scf.if %11 {
      %c0_10 = arith.constant 0 : index
      %c0_11 = arith.constant 0 : index
      %12 = vector.load %arg9[%c0_10, %c0_11] : memref<16x32xf32, #tpu.memory_space<vmem>>, vector<16x32xf32>
      %c0_12 = arith.constant 0 : index
      %c0_13 = arith.constant 0 : index
      %13 = vector.load %arg4[%c0_12, %c0_13] : memref<1x32xf32, #tpu.memory_space<vmem>>, vector<1x32xf32>
      %14 = vector.broadcast %13 : vector<1x32xf32> to vector<16x32xf32>
      %15 = arith.addf %12, %14 : vector<16x32xf32>
      %c0_14 = arith.constant 0 : index
      %c0_15 = arith.constant 0 : index
      %16 = vector.load %arg5[%c0_14, %c0_15] : memref<16x32xbf16, #tpu.memory_space<vmem>>, vector<16x32xbf16>
      %17 = arith.extf %16 : vector<16x32xbf16> to vector<16x32xf32>
      %18 = arith.addf %15, %17 : vector<16x32xf32>
      %cst_16 = arith.constant dense<0.000000e+00> : vector<16xf32>
      %19 = vector.multi_reduction <add>, %18, %cst_16 [1] : vector<16x32xf32> to vector<16xf32>
      %20 = vector.shape_cast %19 : vector<16xf32> to vector<16x1xf32>
      %cst_17 = arith.constant 3.200000e+01 : f32
      %21 = vector.broadcast %cst_17 : f32 to vector<16x1xf32>
      %22 = arith.divf %20, %21 : vector<16x1xf32>
      %23 = vector.broadcast %22 : vector<16x1xf32> to vector<16x32xf32>
      %24 = arith.subf %18, %23 : vector<16x32xf32>
      %25 = arith.mulf %24, %24 : vector<16x32xf32>
      %cst_18 = arith.constant dense<0.000000e+00> : vector<16xf32>
      %26 = vector.multi_reduction <add>, %25, %cst_18 [1] : vector<16x32xf32> to vector<16xf32>
      %27 = vector.shape_cast %26 : vector<16xf32> to vector<16x1xf32>
      %cst_19 = arith.constant 3.200000e+01 : f32
      %28 = vector.broadcast %cst_19 : f32 to vector<16x1xf32>
      %29 = arith.divf %27, %28 : vector<16x1xf32>
      %cst_20 = arith.constant 9.99999996E-13 : f32
      %30 = vector.broadcast %cst_20 : f32 to vector<16x1xf32>
      %31 = arith.addf %29, %30 : vector<16x1xf32>
      %32 = math.rsqrt %31 : vector<16x1xf32>
      %33 = vector.broadcast %22 : vector<16x1xf32> to vector<16x32xf32>
      %34 = arith.subf %18, %33 : vector<16x32xf32>
      %35 = vector.broadcast %32 : vector<16x1xf32> to vector<16x32xf32>
      %36 = arith.mulf %34, %35 : vector<16x32xf32>
      %c0_21 = arith.constant 0 : index
      %c0_22 = arith.constant 0 : index
      %37 = vector.load %arg6[%c0_21, %c0_22] : memref<1x32xf32, #tpu.memory_space<vmem>>, vector<1x32xf32>
      %38 = vector.broadcast %37 : vector<1x32xf32> to vector<16x32xf32>
      %39 = arith.mulf %36, %38 : vector<16x32xf32>
      %c0_23 = arith.constant 0 : index
      %c0_24 = arith.constant 0 : index
      %40 = vector.load %arg7[%c0_23, %c0_24] : memref<1x32xf32, #tpu.memory_space<vmem>>, vector<1x32xf32>
      %41 = vector.broadcast %40 : vector<1x32xf32> to vector<16x32xf32>
      %42 = arith.addf %39, %41 : vector<16x32xf32>
      %43 = arith.truncf %42 : vector<16x32xf32> to vector<16x32xbf16>
      %c0_25 = arith.constant 0 : index
      %c0_26 = arith.constant 0 : index
      %44 = vector.load %arg8[%c0_25, %c0_26] : memref<16x32xbf16, #tpu.memory_space<vmem>>, vector<16x32xbf16>
      tpu.vector_store %arg8[%c0_25, %c0_26], %43 {strides = array<i32>} : memref<16x32xbf16, #tpu.memory_space<vmem>>, vector<16x32xbf16>,
    } else {
    }
    return
  }
  func.func @transform_0(%arg0: i32, %arg1: i32) -> (i32, i32) {
    %c0_i32 = arith.constant 0 : i32
    return %arg0, %arg1 : i32, i32
  }
  func.func @transform_1(%arg0: i32, %arg1: i32) -> (i32, i32) {
    %c0_i32 = arith.constant 0 : i32
    %c0_i32_0 = arith.constant 0 : i32
    return %arg1, %c0_i32 : i32, i32
  }
  func.func @transform_2(%arg0: i32, %arg1: i32) -> (i32, i32) {
    %c0_i32 = arith.constant 0 : i32
    %c0_i32_0 = arith.constant 0 : i32
    %c0_i32_1 = arith.constant 0 : i32
    return %c0_i32, %c0_i32_0 : i32, i32
  }
  func.func @transform_3(%arg0: i32, %arg1: i32) -> (i32, i32) {
    %c0_i32 = arith.constant 0 : i32
    %c0_i32_0 = arith.constant 0 : i32
    return %arg0, %c0_i32 : i32, i32
  }
  func.func @transform_4(%arg0: i32, %arg1: i32) -> (i32, i32) {
    %c0_i32 = arith.constant 0 : i32
    %c0_i32_0 = arith.constant 0 : i32
    %c0_i32_1 = arith.constant 0 : i32
    return %c0_i32, %c0_i32_0 : i32, i32
  }
  func.func @transform_5(%arg0: i32, %arg1: i32) -> (i32, i32) {
    %c0_i32 = arith.constant 0 : i32
    %c0_i32_0 = arith.constant 0 : i32
    %c0_i32_1 = arith.constant 0 : i32
    return %c0_i32, %c0_i32_0 : i32, i32
  }
  func.func @transform_6(%arg0: i32, %arg1: i32) -> (i32, i32) {
    %c0_i32 = arith.constant 0 : i32
    %c0_i32_0 = arith.constant 0 : i32
    return %arg0, %c0_i32 : i32, i32
  }
}

module attributes {stable_mosaic.version = 11 : i64} {
  func.func @_attention_kernel(%arg0: i32, %arg1: memref<1x1x8xf32, #tpu.memory_space<vmem>>, %arg2: memref<1x8x96xbf16, #tpu.memory_space<vmem>>, %arg3: memref<1x8x32xbf16, #tpu.memory_space<vmem>>) attributes {dimension_semantics = [#tpu.dimension_semantics<parallel>], iteration_bounds = array<i64: 2>, scalar_prefetch = 0 : i64, scratch_operands = 0 : i64, tpu.core_type = #tpu.core_type<tc>, window_params = [{transform_indices = @transform_0, window_bounds = array<i64: 1, 1, 8>}, {transform_indices = @transform_1, window_bounds = array<i64: 1, 8, 96>}, {transform_indices = @transform_2, window_bounds = array<i64: 1, 8, 32>}]} {
    %c0 = arith.constant 0 : index
    %c0_0 = arith.constant 0 : index
    %c0_1 = arith.constant 0 : index
    %0 = vector.load %arg1[%c0, %c0_0, %c0_1] : memref<1x1x8xf32, #tpu.memory_space<vmem>>, vector<1x1x8xf32>
    %1 = vector.shape_cast %0 : vector<1x1x8xf32> to vector<1x8xf32>
    %c0_2 = arith.constant 0 : index
    %c0_3 = arith.constant 0 : index
    %c0_4 = arith.constant 0 : index
    %2 = vector.load %arg2[%c0_2, %c0_3, %c0_4] : memref<1x8x96xbf16, #tpu.memory_space<vmem>>, vector<1x8x8xbf16>
    %3 = vector.shape_cast %2 : vector<1x8x8xbf16> to vector<8x8xbf16>
    %c0_5 = arith.constant 0 : index
    %c0_6 = arith.constant 0 : index
    %c32 = arith.constant 32 : index
    %4 = vector.load %arg2[%c0_5, %c0_6, %c32] : memref<1x8x96xbf16, #tpu.memory_space<vmem>>, vector<1x8x8xbf16>
    %5 = vector.shape_cast %4 : vector<1x8x8xbf16> to vector<8x8xbf16>
    %c0_7 = arith.constant 0 : index
    %c0_8 = arith.constant 0 : index
    %c64 = arith.constant 64 : index
    %6 = vector.load %arg2[%c0_7, %c0_8, %c64] : memref<1x8x96xbf16, #tpu.memory_space<vmem>>, vector<1x8x8xbf16>
    %7 = vector.shape_cast %6 : vector<1x8x8xbf16> to vector<8x8xbf16>
    %cst = arith.constant dense<0.000000e+00> : vector<8x8xf32>
    %8 = tpu.matmul %3, %5, %cst {dimension_numbers = #tpu.dot_dimension_numbers<[1], [1], [0], [0], [0, 0, 1, 0], [], []>} : vector<8x8xbf16>, vector<8x8xbf16>, vector<8x8xf32> -> vector<8x8xf32>
    %cst_9 = arith.constant 0.353553385 : f32
    %9 = vector.broadcast %cst_9 : f32 to vector<8x8xf32>
    %10 = arith.mulf %8, %9 : vector<8x8xf32>
    %11 = vector.broadcast %1 : vector<1x8xf32> to vector<8x8xf32>
    %12 = arith.addf %10, %11 : vector<8x8xf32>
    %cst_10 = arith.constant dense<0xFF800000> : vector<8xf32>
    %13 = vector.multi_reduction <maximumf>, %12, %cst_10 [1] : vector<8x8xf32> to vector<8xf32>
    %14 = vector.shape_cast %13 : vector<8xf32> to vector<8x1xf32>
    %15 = vector.broadcast %14 : vector<8x1xf32> to vector<8x8xf32>
    %16 = arith.subf %12, %15 : vector<8x8xf32>
    %17 = math.exp %16 : vector<8x8xf32>
    %cst_11 = arith.constant dense<0.000000e+00> : vector<8xf32>
    %18 = vector.multi_reduction <add>, %17, %cst_11 [1] : vector<8x8xf32> to vector<8xf32>
    %19 = vector.shape_cast %18 : vector<8xf32> to vector<8x1xf32>
    %20 = tpu.reciprocal %19 {approx = true} : vector<8x1xf32> -> vector<8x1xf32>
    %21 = vector.broadcast %20 : vector<8x1xf32> to vector<8x8xf32>
    %22 = arith.mulf %17, %21 : vector<8x8xf32>
    %23 = arith.truncf %22 : vector<8x8xf32> to vector<8x8xbf16>
    %cst_12 = arith.constant dense<0.000000e+00> : vector<8x8xf32>
    %24 = tpu.matmul %23, %7, %cst_12 {dimension_numbers = #tpu.dot_dimension_numbers<[1], [0], [0], [1], [0, 0, 1, 1], [], []>} : vector<8x8xbf16>, vector<8x8xbf16>, vector<8x8xf32> -> vector<8x8xf32>
    %25 = arith.truncf %24 : vector<8x8xf32> to vector<8x8xbf16>
    %c0_13 = arith.constant 0 : index
    %c0_14 = arith.constant 0 : index
    %c0_15 = arith.constant 0 : index
    %26 = vector.load %arg3[%c0_13, %c0_14, %c0_15] : memref<1x8x32xbf16, #tpu.memory_space<vmem>>, vector<1x8x8xbf16>
    %27 = vector.shape_cast %26 : vector<1x8x8xbf16> to vector<8x8xbf16>
    %28 = vector.shape_cast %25 : vector<8x8xbf16> to vector<1x8x8xbf16>
    tpu.vector_store %arg3[%c0_13, %c0_14, %c0_15], %28 {strides = array<i32>} : memref<1x8x32xbf16, #tpu.memory_space<vmem>>, vector<1x8x8xbf16>,
    %c0_16 = arith.constant 0 : index
    %c0_17 = arith.constant 0 : index
    %c8 = arith.constant 8 : index
    %29 = vector.load %arg2[%c0_16, %c0_17, %c8] : memref<1x8x96xbf16, #tpu.memory_space<vmem>>, vector<1x8x8xbf16>
    %30 = vector.shape_cast %29 : vector<1x8x8xbf16> to vector<8x8xbf16>
    %c0_18 = arith.constant 0 : index
    %c0_19 = arith.constant 0 : index
    %c40 = arith.constant 40 : index
    %31 = vector.load %arg2[%c0_18, %c0_19, %c40] : memref<1x8x96xbf16, #tpu.memory_space<vmem>>, vector<1x8x8xbf16>
    %32 = vector.shape_cast %31 : vector<1x8x8xbf16> to vector<8x8xbf16>
    %c0_20 = arith.constant 0 : index
    %c0_21 = arith.constant 0 : index
    %c72 = arith.constant 72 : index
    %33 = vector.load %arg2[%c0_20, %c0_21, %c72] : memref<1x8x96xbf16, #tpu.memory_space<vmem>>, vector<1x8x8xbf16>
    %34 = vector.shape_cast %33 : vector<1x8x8xbf16> to vector<8x8xbf16>
    %cst_22 = arith.constant dense<0.000000e+00> : vector<8x8xf32>
    %35 = tpu.matmul %30, %32, %cst_22 {dimension_numbers = #tpu.dot_dimension_numbers<[1], [1], [0], [0], [0, 0, 1, 0], [], []>} : vector<8x8xbf16>, vector<8x8xbf16>, vector<8x8xf32> -> vector<8x8xf32>
    %cst_23 = arith.constant 0.353553385 : f32
    %36 = vector.broadcast %cst_23 : f32 to vector<8x8xf32>
    %37 = arith.mulf %35, %36 : vector<8x8xf32>
    %38 = vector.broadcast %1 : vector<1x8xf32> to vector<8x8xf32>
    %39 = arith.addf %37, %38 : vector<8x8xf32>
    %cst_24 = arith.constant dense<0xFF800000> : vector<8xf32>
    %40 = vector.multi_reduction <maximumf>, %39, %cst_24 [1] : vector<8x8xf32> to vector<8xf32>
    %41 = vector.shape_cast %40 : vector<8xf32> to vector<8x1xf32>
    %42 = vector.broadcast %41 : vector<8x1xf32> to vector<8x8xf32>
    %43 = arith.subf %39, %42 : vector<8x8xf32>
    %44 = math.exp %43 : vector<8x8xf32>
    %cst_25 = arith.constant dense<0.000000e+00> : vector<8xf32>
    %45 = vector.multi_reduction <add>, %44, %cst_25 [1] : vector<8x8xf32> to vector<8xf32>
    %46 = vector.shape_cast %45 : vector<8xf32> to vector<8x1xf32>
    %47 = tpu.reciprocal %46 {approx = true} : vector<8x1xf32> -> vector<8x1xf32>
    %48 = vector.broadcast %47 : vector<8x1xf32> to vector<8x8xf32>
    %49 = arith.mulf %44, %48 : vector<8x8xf32>
    %50 = arith.truncf %49 : vector<8x8xf32> to vector<8x8xbf16>
    %cst_26 = arith.constant dense<0.000000e+00> : vector<8x8xf32>
    %51 = tpu.matmul %50, %34, %cst_26 {dimension_numbers = #tpu.dot_dimension_numbers<[1], [0], [0], [1], [0, 0, 1, 1], [], []>} : vector<8x8xbf16>, vector<8x8xbf16>, vector<8x8xf32> -> vector<8x8xf32>
    %52 = arith.truncf %51 : vector<8x8xf32> to vector<8x8xbf16>
    %c0_27 = arith.constant 0 : index
    %c0_28 = arith.constant 0 : index
    %c8_29 = arith.constant 8 : index
    %53 = vector.load %arg3[%c0_27, %c0_28, %c8_29] : memref<1x8x32xbf16, #tpu.memory_space<vmem>>, vector<1x8x8xbf16>
    %54 = vector.shape_cast %53 : vector<1x8x8xbf16> to vector<8x8xbf16>
    %55 = vector.shape_cast %52 : vector<8x8xbf16> to vector<1x8x8xbf16>
    tpu.vector_store %arg3[%c0_27, %c0_28, %c8_29], %55 {strides = array<i32>} : memref<1x8x32xbf16, #tpu.memory_space<vmem>>, vector<1x8x8xbf16>,
    %c0_30 = arith.constant 0 : index
    %c0_31 = arith.constant 0 : index
    %c16 = arith.constant 16 : index
    %56 = vector.load %arg2[%c0_30, %c0_31, %c16] : memref<1x8x96xbf16, #tpu.memory_space<vmem>>, vector<1x8x8xbf16>
    %57 = vector.shape_cast %56 : vector<1x8x8xbf16> to vector<8x8xbf16>
    %c0_32 = arith.constant 0 : index
    %c0_33 = arith.constant 0 : index
    %c48 = arith.constant 48 : index
    %58 = vector.load %arg2[%c0_32, %c0_33, %c48] : memref<1x8x96xbf16, #tpu.memory_space<vmem>>, vector<1x8x8xbf16>
    %59 = vector.shape_cast %58 : vector<1x8x8xbf16> to vector<8x8xbf16>
    %c0_34 = arith.constant 0 : index
    %c0_35 = arith.constant 0 : index
    %c80 = arith.constant 80 : index
    %60 = vector.load %arg2[%c0_34, %c0_35, %c80] : memref<1x8x96xbf16, #tpu.memory_space<vmem>>, vector<1x8x8xbf16>
    %61 = vector.shape_cast %60 : vector<1x8x8xbf16> to vector<8x8xbf16>
    %cst_36 = arith.constant dense<0.000000e+00> : vector<8x8xf32>
    %62 = tpu.matmul %57, %59, %cst_36 {dimension_numbers = #tpu.dot_dimension_numbers<[1], [1], [0], [0], [0, 0, 1, 0], [], []>} : vector<8x8xbf16>, vector<8x8xbf16>, vector<8x8xf32> -> vector<8x8xf32>
    %cst_37 = arith.constant 0.353553385 : f32
    %63 = vector.broadcast %cst_37 : f32 to vector<8x8xf32>
    %64 = arith.mulf %62, %63 : vector<8x8xf32>
    %65 = vector.broadcast %1 : vector<1x8xf32> to vector<8x8xf32>
    %66 = arith.addf %64, %65 : vector<8x8xf32>
    %cst_38 = arith.constant dense<0xFF800000> : vector<8xf32>
    %67 = vector.multi_reduction <maximumf>, %66, %cst_38 [1] : vector<8x8xf32> to vector<8xf32>
    %68 = vector.shape_cast %67 : vector<8xf32> to vector<8x1xf32>
    %69 = vector.broadcast %68 : vector<8x1xf32> to vector<8x8xf32>
    %70 = arith.subf %66, %69 : vector<8x8xf32>
    %71 = math.exp %70 : vector<8x8xf32>
    %cst_39 = arith.constant dense<0.000000e+00> : vector<8xf32>
    %72 = vector.multi_reduction <add>, %71, %cst_39 [1] : vector<8x8xf32> to vector<8xf32>
    %73 = vector.shape_cast %72 : vector<8xf32> to vector<8x1xf32>
    %74 = tpu.reciprocal %73 {approx = true} : vector<8x1xf32> -> vector<8x1xf32>
    %75 = vector.broadcast %74 : vector<8x1xf32> to vector<8x8xf32>
    %76 = arith.mulf %71, %75 : vector<8x8xf32>
    %77 = arith.truncf %76 : vector<8x8xf32> to vector<8x8xbf16>
    %cst_40 = arith.constant dense<0.000000e+00> : vector<8x8xf32>
    %78 = tpu.matmul %77, %61, %cst_40 {dimension_numbers = #tpu.dot_dimension_numbers<[1], [0], [0], [1], [0, 0, 1, 1], [], []>} : vector<8x8xbf16>, vector<8x8xbf16>, vector<8x8xf32> -> vector<8x8xf32>
    %79 = arith.truncf %78 : vector<8x8xf32> to vector<8x8xbf16>
    %c0_41 = arith.constant 0 : index
    %c0_42 = arith.constant 0 : index
    %c16_43 = arith.constant 16 : index
    %80 = vector.load %arg3[%c0_41, %c0_42, %c16_43] : memref<1x8x32xbf16, #tpu.memory_space<vmem>>, vector<1x8x8xbf16>
    %81 = vector.shape_cast %80 : vector<1x8x8xbf16> to vector<8x8xbf16>
    %82 = vector.shape_cast %79 : vector<8x8xbf16> to vector<1x8x8xbf16>
    tpu.vector_store %arg3[%c0_41, %c0_42, %c16_43], %82 {strides = array<i32>} : memref<1x8x32xbf16, #tpu.memory_space<vmem>>, vector<1x8x8xbf16>,
    %c0_44 = arith.constant 0 : index
    %c0_45 = arith.constant 0 : index
    %c24 = arith.constant 24 : index
    %83 = vector.load %arg2[%c0_44, %c0_45, %c24] : memref<1x8x96xbf16, #tpu.memory_space<vmem>>, vector<1x8x8xbf16>
    %84 = vector.shape_cast %83 : vector<1x8x8xbf16> to vector<8x8xbf16>
    %c0_46 = arith.constant 0 : index
    %c0_47 = arith.constant 0 : index
    %c56 = arith.constant 56 : index
    %85 = vector.load %arg2[%c0_46, %c0_47, %c56] : memref<1x8x96xbf16, #tpu.memory_space<vmem>>, vector<1x8x8xbf16>
    %86 = vector.shape_cast %85 : vector<1x8x8xbf16> to vector<8x8xbf16>
    %c0_48 = arith.constant 0 : index
    %c0_49 = arith.constant 0 : index
    %c88 = arith.constant 88 : index
    %87 = vector.load %arg2[%c0_48, %c0_49, %c88] : memref<1x8x96xbf16, #tpu.memory_space<vmem>>, vector<1x8x8xbf16>
    %88 = vector.shape_cast %87 : vector<1x8x8xbf16> to vector<8x8xbf16>
    %cst_50 = arith.constant dense<0.000000e+00> : vector<8x8xf32>
    %89 = tpu.matmul %84, %86, %cst_50 {dimension_numbers = #tpu.dot_dimension_numbers<[1], [1], [0], [0], [0, 0, 1, 0], [], []>} : vector<8x8xbf16>, vector<8x8xbf16>, vector<8x8xf32> -> vector<8x8xf32>
    %cst_51 = arith.constant 0.353553385 : f32
    %90 = vector.broadcast %cst_51 : f32 to vector<8x8xf32>
    %91 = arith.mulf %89, %90 : vector<8x8xf32>
    %92 = vector.broadcast %1 : vector<1x8xf32> to vector<8x8xf32>
    %93 = arith.addf %91, %92 : vector<8x8xf32>
    %cst_52 = arith.constant dense<0xFF800000> : vector<8xf32>
    %94 = vector.multi_reduction <maximumf>, %93, %cst_52 [1] : vector<8x8xf32> to vector<8xf32>
    %95 = vector.shape_cast %94 : vector<8xf32> to vector<8x1xf32>
    %96 = vector.broadcast %95 : vector<8x1xf32> to vector<8x8xf32>
    %97 = arith.subf %93, %96 : vector<8x8xf32>
    %98 = math.exp %97 : vector<8x8xf32>
    %cst_53 = arith.constant dense<0.000000e+00> : vector<8xf32>
    %99 = vector.multi_reduction <add>, %98, %cst_53 [1] : vector<8x8xf32> to vector<8xf32>
    %100 = vector.shape_cast %99 : vector<8xf32> to vector<8x1xf32>
    %101 = tpu.reciprocal %100 {approx = true} : vector<8x1xf32> -> vector<8x1xf32>
    %102 = vector.broadcast %101 : vector<8x1xf32> to vector<8x8xf32>
    %103 = arith.mulf %98, %102 : vector<8x8xf32>
    %104 = arith.truncf %103 : vector<8x8xf32> to vector<8x8xbf16>
    %cst_54 = arith.constant dense<0.000000e+00> : vector<8x8xf32>
    %105 = tpu.matmul %104, %88, %cst_54 {dimension_numbers = #tpu.dot_dimension_numbers<[1], [0], [0], [1], [0, 0, 1, 1], [], []>} : vector<8x8xbf16>, vector<8x8xbf16>, vector<8x8xf32> -> vector<8x8xf32>
    %106 = arith.truncf %105 : vector<8x8xf32> to vector<8x8xbf16>
    %c0_55 = arith.constant 0 : index
    %c0_56 = arith.constant 0 : index
    %c24_57 = arith.constant 24 : index
    %107 = vector.load %arg3[%c0_55, %c0_56, %c24_57] : memref<1x8x32xbf16, #tpu.memory_space<vmem>>, vector<1x8x8xbf16>
    %108 = vector.shape_cast %107 : vector<1x8x8xbf16> to vector<8x8xbf16>
    %109 = vector.shape_cast %106 : vector<8x8xbf16> to vector<1x8x8xbf16>
    tpu.vector_store %arg3[%c0_55, %c0_56, %c24_57], %109 {strides = array<i32>} : memref<1x8x32xbf16, #tpu.memory_space<vmem>>, vector<1x8x8xbf16>,
    return
  }
  func.func @transform_0(%arg0: i32) -> (i32, i32, i32) {
    %c0_i32 = arith.constant 0 : i32
    %c0_i32_0 = arith.constant 0 : i32
    %c0_i32_1 = arith.constant 0 : i32
    return %arg0, %c0_i32, %c0_i32_0 : i32, i32, i32
  }
  func.func @transform_1(%arg0: i32) -> (i32, i32, i32) {
    %c0_i32 = arith.constant 0 : i32
    %c0_i32_0 = arith.constant 0 : i32
    %c0_i32_1 = arith.constant 0 : i32
    return %arg0, %c0_i32, %c0_i32_0 : i32, i32, i32
  }
  func.func @transform_2(%arg0: i32) -> (i32, i32, i32) {
    %c0_i32 = arith.constant 0 : i32
    %c0_i32_0 = arith.constant 0 : i32
    %c0_i32_1 = arith.constant 0 : i32
    return %arg0, %c0_i32, %c0_i32_0 : i32, i32, i32
  }
}

module attributes {stable_mosaic.version = 11 : i64} {
  func.func @_linear_kernel(%arg0: i32, %arg1: i32, %arg2: i32, %arg3: memref<16x32xbf16, #tpu.memory_space<vmem>>, %arg4: memref<32x64xbf16, #tpu.memory_space<vmem>>, %arg5: memref<1x64xf32, #tpu.memory_space<vmem>>, %arg6: memref<16x64xbf16, #tpu.memory_space<vmem>>, %arg7: memref<16x64xf32, #tpu.memory_space<vmem>>) attributes {dimension_semantics = [#tpu.dimension_semantics<parallel>, #tpu.dimension_semantics<parallel>, #tpu.dimension_semantics<arbitrary>], iteration_bounds = array<i64: 1, 1, 1>, scalar_prefetch = 0 : i64, scratch_operands = 1 : i64, tpu.core_type = #tpu.core_type<tc>, window_params = [{transform_indices = @transform_0, window_bounds = array<i64: 16, 32>}, {transform_indices = @transform_1, window_bounds = array<i64: 32, 64>}, {transform_indices = @transform_2, window_bounds = array<i64: 1, 64>}, {transform_indices = @transform_3, window_bounds = array<i64: 16, 64>}]} {
    %c0_i32 = arith.constant 0 : i32
    %0 = arith.cmpi eq, %arg2, %c0_i32 : i32
    %1 = arith.extui %0 : i1 to i32
    %c0_i32_0 = arith.constant 0 : i32
    %2 = arith.cmpi ne, %1, %c0_i32_0 : i32
    scf.if %2 {
      %cst_10 = arith.constant 0.000000e+00 : f32
      %12 = vector.broadcast %cst_10 : f32 to vector<16x64xf32>
      %c0_11 = arith.constant 0 : index
      %c0_12 = arith.constant 0 : index
      %13 = vector.load %arg7[%c0_11, %c0_12] : memref<16x64xf32, #tpu.memory_space<vmem>>, vector<16x64xf32>
      tpu.vector_store %arg7[%c0_11, %c0_12], %12 {strides = array<i32>} : memref<16x64xf32, #tpu.memory_space<vmem>>, vector<16x64xf32>,
    } else {
    }
    %c0 = arith.constant 0 : index
    %c0_1 = arith.constant 0 : index
    %3 = vector.load %arg7[%c0, %c0_1] : memref<16x64xf32, #tpu.memory_space<vmem>>, vector<16x64xf32>
    %c0_2 = arith.constant 0 : index
    %c0_3 = arith.constant 0 : index
    %4 = vector.load %arg3[%c0_2, %c0_3] : memref<16x32xbf16, #tpu.memory_space<vmem>>, vector<16x32xbf16>
    %c0_4 = arith.constant 0 : index
    %c0_5 = arith.constant 0 : index
    %5 = vector.load %arg4[%c0_4, %c0_5] : memref<32x64xbf16, #tpu.memory_space<vmem>>, vector<32x64xbf16>
    %cst = arith.constant dense<0.000000e+00> : vector<16x64xf32>
    %6 = tpu.matmul %4, %5, %cst {dimension_numbers = #tpu.dot_dimension_numbers<[1], [0], [0], [1], [0, 0, 1, 1], [], []>} : vector<16x32xbf16>, vector<32x64xbf16>, vector<16x64xf32> -> vector<16x64xf32>
    %7 = arith.addf %3, %6 : vector<16x64xf32>
    %c0_6 = arith.constant 0 : index
    %c0_7 = arith.constant 0 : index
    %8 = vector.load %arg7[%c0_6, %c0_7] : memref<16x64xf32, #tpu.memory_space<vmem>>, vector<16x64xf32>
    tpu.vector_store %arg7[%c0_6, %c0_7], %7 {strides = array<i32>} : memref<16x64xf32, #tpu.memory_space<vmem>>, vector<16x64xf32>,
    %c0_i32_8 = arith.constant 0 : i32
    %9 = arith.cmpi eq, %arg2, %c0_i32_8 : i32
    %10 = arith.extui %9 : i1 to i32
    %c0_i32_9 = arith.constant 0 : i32
    %11 = arith.cmpi ne, %10, %c0_i32_9 : i32
    scf.if %11 {
      %c0_10 = arith.constant 0 : index
      %c0_11 = arith.constant 0 : index
      %12 = vector.load %arg7[%c0_10, %c0_11] : memref<16x64xf32, #tpu.memory_space<vmem>>, vector<16x64xf32>
      %c0_12 = arith.constant 0 : index
      %c0_13 = arith.constant 0 : index
      %13 = vector.load %arg5[%c0_12, %c0_13] : memref<1x64xf32, #tpu.memory_space<vmem>>, vector<1x64xf32>
      %14 = vector.broadcast %13 : vector<1x64xf32> to vector<16x64xf32>
      %15 = arith.addf %12, %14 : vector<16x64xf32>
      %cst_14 = arith.constant 5.000000e-01 : f32
      %16 = vector.broadcast %cst_14 : f32 to vector<16x64xf32>
      %17 = arith.mulf %16, %15 : vector<16x64xf32>
      %cst_15 = arith.constant 0.707106769 : f32
      %18 = vector.broadcast %cst_15 : f32 to vector<16x64xf32>
      %19 = arith.mulf %15, %18 : vector<16x64xf32>
      %20 = math.absf %19 : vector<16x64xf32>
      %cst_16 = arith.constant 0.327591091 : f32
      %21 = vector.broadcast %cst_16 : f32 to vector<16x64xf32>
      %22 = arith.mulf %21, %20 : vector<16x64xf32>
      %cst_17 = arith.constant 1.000000e+00 : f32
      %23 = vector.broadcast %cst_17 : f32 to vector<16x64xf32>
      %24 = arith.addf %23, %22 : vector<16x64xf32>
      %cst_18 = arith.constant 1.000000e+00 : f32
      %25 = vector.broadcast %cst_18 : f32 to vector<16x64xf32>
      %26 = arith.divf %25, %24 : vector<16x64xf32>
      %cst_19 = arith.constant 1.06140542 : f32
      %27 = vector.broadcast %cst_19 : f32 to vector<16x64xf32>
      %28 = arith.mulf %26, %27 : vector<16x64xf32>
      %cst_20 = arith.constant -1.45315206 : f32
      %29 = vector.broadcast %cst_20 : f32 to vector<16x64xf32>
      %30 = arith.addf %29, %28 : vector<16x64xf32>
      %31 = arith.mulf %26, %30 : vector<16x64xf32>
      %cst_21 = arith.constant 1.42141378 : f32
      %32 = vector.broadcast %cst_21 : f32 to vector<16x64xf32>
      %33 = arith.addf %32, %31 : vector<16x64xf32>
      %34 = arith.mulf %26, %33 : vector<16x64xf32>
      %cst_22 = arith.constant -0.284496725 : f32
      %35 = vector.broadcast %cst_22 : f32 to vector<16x64xf32>
      %36 = arith.addf %35, %34 : vector<16x64xf32>
      %37 = arith.mulf %26, %36 : vector<16x64xf32>
      %cst_23 = arith.constant 0.254829586 : f32
      %38 = vector.broadcast %cst_23 : f32 to vector<16x64xf32>
      %39 = arith.addf %38, %37 : vector<16x64xf32>
      %40 = arith.mulf %26, %39 : vector<16x64xf32>
      %cst_24 = arith.constant 0.000000e+00 : f32
      %41 = vector.broadcast %cst_24 : f32 to vector<16x64xf32>
      %42 = arith.subf %41, %20 : vector<16x64xf32>
      %43 = arith.mulf %42, %20 : vector<16x64xf32>
      %44 = math.exp %43 : vector<16x64xf32>
      %45 = arith.mulf %40, %44 : vector<16x64xf32>
      %cst_25 = arith.constant 1.000000e+00 : f32
      %46 = vector.broadcast %cst_25 : f32 to vector<16x64xf32>
      %47 = arith.subf %46, %45 : vector<16x64xf32>
      %cst_26 = arith.constant 0.000000e+00 : f32
      %48 = vector.broadcast %cst_26 : f32 to vector<16x64xf32>
      %49 = arith.cmpf olt, %19, %48 : vector<16x64xf32>
      %cst_27 = arith.constant 0.000000e+00 : f32
      %50 = vector.broadcast %cst_27 : f32 to vector<16x64xf32>
      %51 = arith.subf %50, %47 : vector<16x64xf32>
      %52 = arith.select %49, %51, %47 : vector<16x64xi1>, vector<16x64xf32>
      %cst_28 = arith.constant 1.000000e+00 : f32
      %53 = vector.broadcast %cst_28 : f32 to vector<16x64xf32>
      %54 = arith.addf %53, %52 : vector<16x64xf32>
      %55 = arith.mulf %17, %54 : vector<16x64xf32>
      %56 = arith.truncf %55 : vector<16x64xf32> to vector<16x64xbf16>
      %c0_29 = arith.constant 0 : index
      %c0_30 = arith.constant 0 : index
      %57 = vector.load %arg6[%c0_29, %c0_30] : memref<16x64xbf16, #tpu.memory_space<vmem>>, vector<16x64xbf16>
      tpu.vector_store %arg6[%c0_29, %c0_30], %56 {strides = array<i32>} : memref<16x64xbf16, #tpu.memory_space<vmem>>, vector<16x64xbf16>,
    } else {
    }
    return
  }
  func.func @transform_0(%arg0: i32, %arg1: i32, %arg2: i32) -> (i32, i32) {
    %c0_i32 = arith.constant 0 : i32
    return %arg0, %arg2 : i32, i32
  }
  func.func @transform_1(%arg0: i32, %arg1: i32, %arg2: i32) -> (i32, i32) {
    %c0_i32 = arith.constant 0 : i32
    return %arg2, %arg1 : i32, i32
  }
  func.func @transform_2(%arg0: i32, %arg1: i32, %arg2: i32) -> (i32, i32) {
    %c0_i32 = arith.constant 0 : i32
    %c0_i32_0 = arith.constant 0 : i32
    return %c0_i32, %arg1 : i32, i32
  }
  func.func @transform_3(%arg0: i32, %arg1: i32, %arg2: i32) -> (i32, i32) {
    %c0_i32 = arith.constant 0 : i32
    return %arg0, %arg1 : i32, i32
  }
}

module attributes {stable_mosaic.version = 11 : i64} {
  func.func @_linear_res_ln_kernel(%arg0: i32, %arg1: i32, %arg2: memref<16x64xbf16, #tpu.memory_space<vmem>>, %arg3: memref<64x32xbf16, #tpu.memory_space<vmem>>, %arg4: memref<1x32xf32, #tpu.memory_space<vmem>>, %arg5: memref<16x32xbf16, #tpu.memory_space<vmem>>, %arg6: memref<1x32xf32, #tpu.memory_space<vmem>>, %arg7: memref<1x32xf32, #tpu.memory_space<vmem>>, %arg8: memref<16x32xbf16, #tpu.memory_space<vmem>>, %arg9: memref<16x32xf32, #tpu.memory_space<vmem>>) attributes {dimension_semantics = [#tpu.dimension_semantics<parallel>, #tpu.dimension_semantics<arbitrary>], iteration_bounds = array<i64: 1, 1>, scalar_prefetch = 0 : i64, scratch_operands = 1 : i64, tpu.core_type = #tpu.core_type<tc>, window_params = [{transform_indices = @transform_0, window_bounds = array<i64: 16, 64>}, {transform_indices = @transform_1, window_bounds = array<i64: 64, 32>}, {pipeline_mode = #tpu.pipeline_mode<synchronous>, transform_indices = @transform_2, window_bounds = array<i64: 1, 32>}, {transform_indices = @transform_3, window_bounds = array<i64: 16, 32>}, {pipeline_mode = #tpu.pipeline_mode<synchronous>, transform_indices = @transform_4, window_bounds = array<i64: 1, 32>}, {pipeline_mode = #tpu.pipeline_mode<synchronous>, transform_indices = @transform_5, window_bounds = array<i64: 1, 32>}, {transform_indices = @transform_6, window_bounds = array<i64: 16, 32>}]} {
    %c0_i32 = arith.constant 0 : i32
    %0 = arith.cmpi eq, %arg1, %c0_i32 : i32
    %1 = arith.extui %0 : i1 to i32
    %c0_i32_0 = arith.constant 0 : i32
    %2 = arith.cmpi ne, %1, %c0_i32_0 : i32
    scf.if %2 {
      %cst_10 = arith.constant 0.000000e+00 : f32
      %12 = vector.broadcast %cst_10 : f32 to vector<16x32xf32>
      %c0_11 = arith.constant 0 : index
      %c0_12 = arith.constant 0 : index
      %13 = vector.load %arg9[%c0_11, %c0_12] : memref<16x32xf32, #tpu.memory_space<vmem>>, vector<16x32xf32>
      tpu.vector_store %arg9[%c0_11, %c0_12], %12 {strides = array<i32>} : memref<16x32xf32, #tpu.memory_space<vmem>>, vector<16x32xf32>,
    } else {
    }
    %c0 = arith.constant 0 : index
    %c0_1 = arith.constant 0 : index
    %3 = vector.load %arg9[%c0, %c0_1] : memref<16x32xf32, #tpu.memory_space<vmem>>, vector<16x32xf32>
    %c0_2 = arith.constant 0 : index
    %c0_3 = arith.constant 0 : index
    %4 = vector.load %arg2[%c0_2, %c0_3] : memref<16x64xbf16, #tpu.memory_space<vmem>>, vector<16x64xbf16>
    %c0_4 = arith.constant 0 : index
    %c0_5 = arith.constant 0 : index
    %5 = vector.load %arg3[%c0_4, %c0_5] : memref<64x32xbf16, #tpu.memory_space<vmem>>, vector<64x32xbf16>
    %cst = arith.constant dense<0.000000e+00> : vector<16x32xf32>
    %6 = tpu.matmul %4, %5, %cst {dimension_numbers = #tpu.dot_dimension_numbers<[1], [0], [0], [1], [0, 0, 1, 1], [], []>} : vector<16x64xbf16>, vector<64x32xbf16>, vector<16x32xf32> -> vector<16x32xf32>
    %7 = arith.addf %3, %6 : vector<16x32xf32>
    %c0_6 = arith.constant 0 : index
    %c0_7 = arith.constant 0 : index
    %8 = vector.load %arg9[%c0_6, %c0_7] : memref<16x32xf32, #tpu.memory_space<vmem>>, vector<16x32xf32>
    tpu.vector_store %arg9[%c0_6, %c0_7], %7 {strides = array<i32>} : memref<16x32xf32, #tpu.memory_space<vmem>>, vector<16x32xf32>,
    %c0_i32_8 = arith.constant 0 : i32
    %9 = arith.cmpi eq, %arg1, %c0_i32_8 : i32
    %10 = arith.extui %9 : i1 to i32
    %c0_i32_9 = arith.constant 0 : i32
    %11 = arith.cmpi ne, %10, %c0_i32_9 : i32
    scf.if %11 {
      %c0_10 = arith.constant 0 : index
      %c0_11 = arith.constant 0 : index
      %12 = vector.load %arg9[%c0_10, %c0_11] : memref<16x32xf32, #tpu.memory_space<vmem>>, vector<16x32xf32>
      %c0_12 = arith.constant 0 : index
      %c0_13 = arith.constant 0 : index
      %13 = vector.load %arg4[%c0_12, %c0_13] : memref<1x32xf32, #tpu.memory_space<vmem>>, vector<1x32xf32>
      %14 = vector.broadcast %13 : vector<1x32xf32> to vector<16x32xf32>
      %15 = arith.addf %12, %14 : vector<16x32xf32>
      %c0_14 = arith.constant 0 : index
      %c0_15 = arith.constant 0 : index
      %16 = vector.load %arg5[%c0_14, %c0_15] : memref<16x32xbf16, #tpu.memory_space<vmem>>, vector<16x32xbf16>
      %17 = arith.extf %16 : vector<16x32xbf16> to vector<16x32xf32>
      %18 = arith.addf %15, %17 : vector<16x32xf32>
      %cst_16 = arith.constant dense<0.000000e+00> : vector<16xf32>
      %19 = vector.multi_reduction <add>, %18, %cst_16 [1] : vector<16x32xf32> to vector<16xf32>
      %20 = vector.shape_cast %19 : vector<16xf32> to vector<16x1xf32>
      %cst_17 = arith.constant 3.200000e+01 : f32
      %21 = vector.broadcast %cst_17 : f32 to vector<16x1xf32>
      %22 = arith.divf %20, %21 : vector<16x1xf32>
      %23 = vector.broadcast %22 : vector<16x1xf32> to vector<16x32xf32>
      %24 = arith.subf %18, %23 : vector<16x32xf32>
      %25 = arith.mulf %24, %24 : vector<16x32xf32>
      %cst_18 = arith.constant dense<0.000000e+00> : vector<16xf32>
      %26 = vector.multi_reduction <add>, %25, %cst_18 [1] : vector<16x32xf32> to vector<16xf32>
      %27 = vector.shape_cast %26 : vector<16xf32> to vector<16x1xf32>
      %cst_19 = arith.constant 3.200000e+01 : f32
      %28 = vector.broadcast %cst_19 : f32 to vector<16x1xf32>
      %29 = arith.divf %27, %28 : vector<16x1xf32>
      %cst_20 = arith.constant 9.99999996E-13 : f32
      %30 = vector.broadcast %cst_20 : f32 to vector<16x1xf32>
      %31 = arith.addf %29, %30 : vector<16x1xf32>
      %32 = math.rsqrt %31 : vector<16x1xf32>
      %33 = vector.broadcast %22 : vector<16x1xf32> to vector<16x32xf32>
      %34 = arith.subf %18, %33 : vector<16x32xf32>
      %35 = vector.broadcast %32 : vector<16x1xf32> to vector<16x32xf32>
      %36 = arith.mulf %34, %35 : vector<16x32xf32>
      %c0_21 = arith.constant 0 : index
      %c0_22 = arith.constant 0 : index
      %37 = vector.load %arg6[%c0_21, %c0_22] : memref<1x32xf32, #tpu.memory_space<vmem>>, vector<1x32xf32>
      %38 = vector.broadcast %37 : vector<1x32xf32> to vector<16x32xf32>
      %39 = arith.mulf %36, %38 : vector<16x32xf32>
      %c0_23 = arith.constant 0 : index
      %c0_24 = arith.constant 0 : index
      %40 = vector.load %arg7[%c0_23, %c0_24] : memref<1x32xf32, #tpu.memory_space<vmem>>, vector<1x32xf32>
      %41 = vector.broadcast %40 : vector<1x32xf32> to vector<16x32xf32>
      %42 = arith.addf %39, %41 : vector<16x32xf32>
      %43 = arith.truncf %42 : vector<16x32xf32> to vector<16x32xbf16>
      %c0_25 = arith.constant 0 : index
      %c0_26 = arith.constant 0 : index
      %44 = vector.load %arg8[%c0_25, %c0_26] : memref<16x32xbf16, #tpu.memory_space<vmem>>, vector<16x32xbf16>
      tpu.vector_store %arg8[%c0_25, %c0_26], %43 {strides = array<i32>} : memref<16x32xbf16, #tpu.memory_space<vmem>>, vector<16x32xbf16>,
    } else {
    }
    return
  }
  func.func @transform_0(%arg0: i32, %arg1: i32) -> (i32, i32) {
    %c0_i32 = arith.constant 0 : i32
    return %arg0, %arg1 : i32, i32
  }
  func.func @transform_1(%arg0: i32, %arg1: i32) -> (i32, i32) {
    %c0_i32 = arith.constant 0 : i32
    %c0_i32_0 = arith.constant 0 : i32
    return %arg1, %c0_i32 : i32, i32
  }
  func.func @transform_2(%arg0: i32, %arg1: i32) -> (i32, i32) {
    %c0_i32 = arith.constant 0 : i32
    %c0_i32_0 = arith.constant 0 : i32
    %c0_i32_1 = arith.constant 0 : i32
    return %c0_i32, %c0_i32_0 : i32, i32
  }
  func.func @transform_3(%arg0: i32, %arg1: i32) -> (i32, i32) {
    %c0_i32 = arith.constant 0 : i32
    %c0_i32_0 = arith.constant 0 : i32
    return %arg0, %c0_i32 : i32, i32
  }
  func.func @transform_4(%arg0: i32, %arg1: i32) -> (i32, i32) {
    %c0_i32 = arith.constant 0 : i32
    %c0_i32_0 = arith.constant 0 : i32
    %c0_i32_1 = arith.constant 0 : i32
    return %c0_i32, %c0_i32_0 : i32, i32
  }
  func.func @transform_5(%arg0: i32, %arg1: i32) -> (i32, i32) {
    %c0_i32 = arith.constant 0 : i32
    %c0_i32_0 = arith.constant 0 : i32
    %c0_i32_1 = arith.constant 0 : i32
    return %c0_i32, %c0_i32_0 : i32, i32
  }
  func.func @transform_6(%arg0: i32, %arg1: i32) -> (i32, i32) {
    %c0_i32 = arith.constant 0 : i32
    %c0_i32_0 = arith.constant 0 : i32
    return %arg0, %c0_i32 : i32, i32
  }
}

module attributes {stable_mosaic.version = 11 : i64} {
  func.func @_linear_kernel(%arg0: i32, %arg1: i32, %arg2: i32, %arg3: memref<2x32xbf16, #tpu.memory_space<vmem>>, %arg4: memref<32x32xbf16, #tpu.memory_space<vmem>>, %arg5: memref<1x32xf32, #tpu.memory_space<vmem>>, %arg6: memref<2x32xf32, #tpu.memory_space<vmem>>, %arg7: memref<2x32xf32, #tpu.memory_space<vmem>>) attributes {dimension_semantics = [#tpu.dimension_semantics<parallel>, #tpu.dimension_semantics<parallel>, #tpu.dimension_semantics<arbitrary>], iteration_bounds = array<i64: 1, 1, 1>, scalar_prefetch = 0 : i64, scratch_operands = 1 : i64, tpu.core_type = #tpu.core_type<tc>, window_params = [{transform_indices = @transform_0, window_bounds = array<i64: 2, 32>}, {transform_indices = @transform_1, window_bounds = array<i64: 32, 32>}, {transform_indices = @transform_2, window_bounds = array<i64: 1, 32>}, {transform_indices = @transform_3, window_bounds = array<i64: 2, 32>}]} {
    %c0_i32 = arith.constant 0 : i32
    %0 = arith.cmpi eq, %arg2, %c0_i32 : i32
    %1 = arith.extui %0 : i1 to i32
    %c0_i32_0 = arith.constant 0 : i32
    %2 = arith.cmpi ne, %1, %c0_i32_0 : i32
    scf.if %2 {
      %cst_10 = arith.constant 0.000000e+00 : f32
      %12 = vector.broadcast %cst_10 : f32 to vector<2x32xf32>
      %c0_11 = arith.constant 0 : index
      %c0_12 = arith.constant 0 : index
      %13 = vector.load %arg7[%c0_11, %c0_12] : memref<2x32xf32, #tpu.memory_space<vmem>>, vector<2x32xf32>
      tpu.vector_store %arg7[%c0_11, %c0_12], %12 {strides = array<i32>} : memref<2x32xf32, #tpu.memory_space<vmem>>, vector<2x32xf32>,
    } else {
    }
    %c0 = arith.constant 0 : index
    %c0_1 = arith.constant 0 : index
    %3 = vector.load %arg7[%c0, %c0_1] : memref<2x32xf32, #tpu.memory_space<vmem>>, vector<2x32xf32>
    %c0_2 = arith.constant 0 : index
    %c0_3 = arith.constant 0 : index
    %4 = vector.load %arg3[%c0_2, %c0_3] : memref<2x32xbf16, #tpu.memory_space<vmem>>, vector<2x32xbf16>
    %c0_4 = arith.constant 0 : index
    %c0_5 = arith.constant 0 : index
    %5 = vector.load %arg4[%c0_4, %c0_5] : memref<32x32xbf16, #tpu.memory_space<vmem>>, vector<32x32xbf16>
    %cst = arith.constant dense<0.000000e+00> : vector<2x32xf32>
    %6 = tpu.matmul %4, %5, %cst {dimension_numbers = #tpu.dot_dimension_numbers<[1], [0], [0], [1], [0, 0, 1, 1], [], []>} : vector<2x32xbf16>, vector<32x32xbf16>, vector<2x32xf32> -> vector<2x32xf32>
    %7 = arith.addf %3, %6 : vector<2x32xf32>
    %c0_6 = arith.constant 0 : index
    %c0_7 = arith.constant 0 : index
    %8 = vector.load %arg7[%c0_6, %c0_7] : memref<2x32xf32, #tpu.memory_space<vmem>>, vector<2x32xf32>
    tpu.vector_store %arg7[%c0_6, %c0_7], %7 {strides = array<i32>} : memref<2x32xf32, #tpu.memory_space<vmem>>, vector<2x32xf32>,
    %c0_i32_8 = arith.constant 0 : i32
    %9 = arith.cmpi eq, %arg2, %c0_i32_8 : i32
    %10 = arith.extui %9 : i1 to i32
    %c0_i32_9 = arith.constant 0 : i32
    %11 = arith.cmpi ne, %10, %c0_i32_9 : i32
    scf.if %11 {
      %c0_10 = arith.constant 0 : index
      %c0_11 = arith.constant 0 : index
      %12 = vector.load %arg7[%c0_10, %c0_11] : memref<2x32xf32, #tpu.memory_space<vmem>>, vector<2x32xf32>
      %c0_12 = arith.constant 0 : index
      %c0_13 = arith.constant 0 : index
      %13 = vector.load %arg5[%c0_12, %c0_13] : memref<1x32xf32, #tpu.memory_space<vmem>>, vector<1x32xf32>
      %14 = vector.broadcast %13 : vector<1x32xf32> to vector<2x32xf32>
      %15 = arith.addf %12, %14 : vector<2x32xf32>
      %16 = math.tanh %15 : vector<2x32xf32>
      %c0_14 = arith.constant 0 : index
      %c0_15 = arith.constant 0 : index
      %17 = vector.load %arg6[%c0_14, %c0_15] : memref<2x32xf32, #tpu.memory_space<vmem>>, vector<2x32xf32>
      tpu.vector_store %arg6[%c0_14, %c0_15], %16 {strides = array<i32>} : memref<2x32xf32, #tpu.memory_space<vmem>>, vector<2x32xf32>,
    } else {
    }
    return
  }
  func.func @transform_0(%arg0: i32, %arg1: i32, %arg2: i32) -> (i32, i32) {
    %c0_i32 = arith.constant 0 : i32
    return %arg0, %arg2 : i32, i32
  }
  func.func @transform_1(%arg0: i32, %arg1: i32, %arg2: i32) -> (i32, i32) {
    %c0_i32 = arith.constant 0 : i32
    return %arg2, %arg1 : i32, i32
  }
  func.func @transform_2(%arg0: i32, %arg1: i32, %arg2: i32) -> (i32, i32) {
    %c0_i32 = arith.constant 0 : i32
    %c0_i32_0 = arith.constant 0 : i32
    return %c0_i32, %arg1 : i32, i32
  }
  func.func @transform_3(%arg0: i32, %arg1: i32, %arg2: i32) -> (i32, i32) {
    %c0_i32 = arith.constant 0 : i32
    return %arg0, %arg1 : i32, i32
  }
}

</mosaic_0001>

<llo_original>
// kernel: bert_classifier_forward.12
$region0: #{bert_classifier_forward.12}
  #allocation0 [shape = 'u32[]', space=smem, size = 0x4, offset = 0x4, fixed_abs, tag = 'smem constant byte address 0x4 - core index']
  #allocation1 [shape = 'u32[72,128]{1,0:T(1,128)}', space=vmem, size = 0x9000, scoped, tag = 'internal scratch']
  %s0 = inlined_call_operand.vmem [shape: f32[16,32], index: 0, kind: input, shape index: {}]
  %s1 = inlined_call_operand.vmem [shape: f32[1,32], index: 1, kind: input, shape index: {}]
  %s2 = inlined_call_operand.vmem [shape: f32[1,32], index: 2, kind: input, shape index: {}]
  %s3 = inlined_call_operand.vmem [shape: bf16[16,32], index: 3, kind: output, shape index: {}]
  %s4 = sld [smem:[#allocation0]]
  $region22: #{bert_classifier_forward.12} parent=0
    _
  %s6 = ssub.s32 1, %s4
  %s7 = scalar_select 0, %s6, %s4
  // Predicated region
  $region2: #{bert_classifier_forward.12} parent=0 // pred_check
    _
  $region3: #{bert_classifier_forward.12} parent=0 // pred_check_branch
    %9 = sbr.rel (0) target = $region5
  $region4: #{bert_classifier_forward.12} parent=0 // pred_region
    _
  $region5: #{bert_classifier_forward.12} parent=0 // pred_fallthru
    _
  // Predicated region
  $region6: #{bert_classifier_forward.12} parent=0 // pred_check
    _
  $region7: #{bert_classifier_forward.12} parent=0 // pred_check_branch
    %11 = sbr.rel (0) target = $region9
  $region8: #{bert_classifier_forward.12} parent=0 // pred_region
    _
  $region9: #{bert_classifier_forward.12} parent=0 // pred_fallthru
    _
  // Predicated region
  $region10: #{bert_classifier_forward.12} parent=0 // pred_check
    _
  $region11: #{bert_classifier_forward.12} parent=0 // pred_check_branch
    %13 = sbr.rel (0) target = $region13
  $region12: #{bert_classifier_forward.12} parent=0 // pred_region
    _
  $region13: #{bert_classifier_forward.12} parent=0 // pred_fallthru
    _
  %v14 = vld [vmem:[%s0] sm:$0xff]
  %v15 = vld [vmem:[%s0 + $0x8] sm:$0xff]
  %vm16 = vcmask 261120
  %v17 = vsel %vm16, %v14, 0.0
  %18 = vadd.xlane.f32.xlu0 %v17
  %v19 = vpop.xlane.xlu0 %18
  %v20 = vsel %vm16, %v15, 0.0
  %21 = vadd.xlane.f32.xlu0 %v20
  %v22 = vpop.xlane.xlu0 %21
  %v23 = vrcp.pop 32.0
  %v24 = vmul.f32 32.0, %v23
  %v25 = vsub.f32 1.0, %v24
  %v26 = vmul.f32 %v23, %v25
  %v27 = vadd.f32 %v23, %v26
  %vm28 = vweird.f32 %v23
  %v29 = vsel %vm28, %v23, %v27
  %v30 = vmul.f32 %v19, %v29
  %v31 = vmul.f32 %v22, %v29
  %v32 = vsub.f32 %v14, %v30
  %v33 = vsub.f32 %v15, %v31
  %v34 = vmul.f32 %v32, %v32
  %v35 = vmul.f32 %v33, %v33
  %v36 = vsel %vm16, %v34, 0.0
  %37 = vadd.xlane.f32.xlu0 %v36
  %v38 = vpop.xlane.xlu0 %37
  %v39 = vsel %vm16, %v35, 0.0
  %40 = vadd.xlane.f32.xlu0 %v39
  %v41 = vpop.xlane.xlu0 %40
  %v42 = vmul.f32 %v38, %v29
  %v43 = vmul.f32 %v41, %v29
  %v44 = vadd.f32 %v42, 1e-12
  %v45 = vadd.f32 %v43, 1e-12
  %v46 = vrsqrt.pop %v44
  %v47 = vmul.f32 %v46, %v44
  %v48 = vmul.f32 %v47, %v46
  %v49 = vmul.f32 0.5, %v48
  %v50 = vsub.f32 1.5, %v49
  %v51 = vmul.f32 %v46, %v50
  %vm52 = vweird.f32 %v44
  %vm53 = vweird.f32 %v46
  %vm54 = vmor %vm52, %vm53
  %v55 = vsel %vm54, %v46, %v51
  %v56 = vrsqrt.pop %v45
  %v57 = vmul.f32 %v56, %v45
  %v58 = vmul.f32 %v57, %v56
  %v59 = vmul.f32 0.5, %v58
  %v60 = vsub.f32 1.5, %v59
  %v61 = vmul.f32 %v56, %v60
  %vm62 = vweird.f32 %v45
  %vm63 = vweird.f32 %v56
  %vm64 = vmor %vm62, %vm63
  %v65 = vsel %vm64, %v56, %v61
  %v66 = vmul.f32 %v32, %v55
  %v67 = vmul.f32 %v33, %v65
  %v68 = vld [vmem:[%s1] sm:$0x1]
  %v70 = vperm.slane %v68, 0
  %v72 = vmul.f32 %v66, %v70
  %v73 = vmul.f32 %v67, %v70
  %v74 = vld [vmem:[%s2] sm:$0x1]
  %v76 = vperm.slane %v74, 0
  %v78 = vadd.f32 %v72, %v76
  %v79 = vadd.f32 %v73, %v76
  %v80 = vpack.c.bf16 %v78, %v78
  %v81 = vpack.c.bf16 %v79, %v79
  %vm82 = vcmask 257024
  %83 = vst.msk [vmem:[%s3] sm:$0xf] %vm82, %v80
  %84 = vst.msk [vmem:[%s3 + $0x4] sm:$0xf] %vm82, %v81
  // Predicated region
  $region14: #{bert_classifier_forward.12} parent=0 // pred_check
    _
  $region15: #{bert_classifier_forward.12} parent=0 // pred_check_branch
    %86 = sbr.rel (0) target = $region17
  $region16: #{bert_classifier_forward.12} parent=0 // pred_region
    _
  $region17: #{bert_classifier_forward.12} parent=0 // pred_fallthru
    _
  // Predicated region
  $region18: #{bert_classifier_forward.12} parent=0 // pred_check
    _
  $region19: #{bert_classifier_forward.12} parent=0 // pred_check_branch
    %88 = sbr.rel (0) target = $region21
  $region20: #{bert_classifier_forward.12} parent=0 // pred_region
    _
  $region21: #{bert_classifier_forward.12} parent=0 // pred_fallthru
    _

// kernel: bert_classifier_forward.13
$region0: #{bert_classifier_forward.13}
  #allocation0 [shape = 'u32[]', space=smem, size = 0x4, offset = 0x4, fixed_abs, tag = 'smem constant byte address 0x4 - core index']
  #allocation1 [shape = 'u32[72,128]{1,0:T(1,128)}', space=vmem, size = 0x9000, scoped, tag = 'internal scratch']
  #allocation2 [shape = 'f32[16,96]{1,0:T(8,128)}', space=vmem, size = 0x2000, scoped, tag = 'scratch operand']
  %s0 = inlined_call_operand.vmem [shape: bf16[16,32], index: 0, kind: input, shape index: {}]
  %s1 = inlined_call_operand.vmem [shape: bf16[32,96], index: 1, kind: input, shape index: {}]
  %s2 = inlined_call_operand.vmem [shape: f32[1,96], index: 2, kind: input, shape index: {}]
  %s3 = inlined_call_operand.vmem [shape: bf16[16,96], index: 3, kind: output, shape index: {}]
  %s4 = sld [smem:[#allocation0]]
  $region30: #{bert_classifier_forward.13} parent=0
    _
  %s6 = ssub.s32 1, %s4
  %s7 = scalar_select 0, %s6, %s4
  // Predicated region
  $region2: #{bert_classifier_forward.13} parent=0 // pred_check
    _
  $region3: #{bert_classifier_forward.13} parent=0 // pred_check_branch
    %9 = sbr.rel (0) target = $region5
  $region4: #{bert_classifier_forward.13} parent=0 // pred_region
    _
  $region5: #{bert_classifier_forward.13} parent=0 // pred_fallthru
    _
  // Predicated region
  $region6: #{bert_classifier_forward.13} parent=0 // pred_check
    _
  $region7: #{bert_classifier_forward.13} parent=0 // pred_check_branch
    %11 = sbr.rel (0) target = $region9
  $region8: #{bert_classifier_forward.13} parent=0 // pred_region
    _
  $region9: #{bert_classifier_forward.13} parent=0 // pred_fallthru
    _
  // Predicated region
  $region10: #{bert_classifier_forward.13} parent=0 // pred_check
    _
  $region11: #{bert_classifier_forward.13} parent=0 // pred_check_branch
    %13 = sbr.rel (0) target = $region13
  $region12: #{bert_classifier_forward.13} parent=0 // pred_region
    _
  $region13: #{bert_classifier_forward.13} parent=0 // pred_fallthru
    _
  %p15 = scmp.eq.s32.totalorder 0, 0
  // Predicated region
  $region14: #{bert_classifier_forward.13} parent=0 // pred_check
    %p16 = pneg %p15
  $region15: #{bert_classifier_forward.13} parent=0 // pred_check_branch
    %18 = sbr.rel (%p16) target = $region17
  $region16: #{bert_classifier_forward.13} parent=0 // pred_region
    %vm19 = vcmask 785408
    %20 = vst.msk [vmem:[#allocation2] sm:$0xff] %vm19, 0.0
    %21 = vst.msk [vmem:[#allocation2 + $0x8] sm:$0xff] %vm19, 0.0
  $region17: #{bert_classifier_forward.13} parent=0 // pred_fallthru
    _
  %v22 = vld [vmem:[#allocation2] sm:$0xff]
  %v23 = vld [vmem:[#allocation2 + $0x8] sm:$0xff]
  %v24 = vld [vmem:[%s0] sm:$0xf]
  %v25 = vld [vmem:[%s0 + $0x4] sm:$0xf]
  %v26 = vld [vmem:[%s1] sm:$0xf]
  %v27 = vld [vmem:[%s1 + $0x4] sm:$0xf]
  %v28 = vld [vmem:[%s1 + $0x8] sm:$0xf]
  %v29 = vld [vmem:[%s1 + $0xc] sm:$0xf]
  %v32 = vunpack.c.l.b16 %v24
  %v33 = vunpack.c.l.b16 %v25
  %v34 = vpack.c.b16 %v33, %v32
  %v39 = vunpack.c.l.b16 %v26
  %v40 = vunpack.c.l.b16 %v27
  %v41 = vunpack.c.l.b16 %v28
  %v42 = vunpack.c.l.b16 %v29
  %v43 = vpack.c.b16 %v40, %v39
  %v44 = vpack.c.b16 %v42, %v41
  %vm47 = vcmask 261120
  %v49 = vsel %vm47, %v34, 0
  %51 = vmatpush.bf16.msra.mxu0 0
  %52 = vmatpush.bf16.msra.mxu0 0
  %53 = vmatpush.bf16.msra.mxu0 0
  %54 = vmatpush.bf16.msra.mxu0 0
  %55 = vmatpush.bf16.msra.mxu0 0
  %56 = vmatpush.bf16.msra.mxu0 0
  %57 = vmatpush.bf16.msra.mxu0 %v44
  %58 = vmatpush.bf16.msra.mxu0 %v43
  %59 = vmatmul.bf16.gmra.mxu0 %v49
  %v60 = vpop.f32.mrf.mxu0
  %v61 = vadd.f32 0.0, %v60
  %v62 = vpop.f32.mrf.mxu0
  %v63 = vadd.f32 0.0, %v62
  %64 = vdwg.mxu0
  %v65 = vadd.f32 %v22, %v61
  %v66 = vadd.f32 %v23, %v63
  %vm67 = vcmask 785408
  %68 = vst.msk [vmem:[#allocation2] sm:$0xff] %vm67, %v65
  %69 = vst.msk [vmem:[#allocation2 + $0x8] sm:$0xff] %vm67, %v66
  // Predicated region
  $region18: #{bert_classifier_forward.13} parent=0 // pred_check
    %p70 = pneg %p15
  $region19: #{bert_classifier_forward.13} parent=0 // pred_check_branch
    %72 = sbr.rel (%p70) target = $region21
  $region20: #{bert_classifier_forward.13} parent=0 // pred_region
    %v73 = vld [vmem:[#allocation2] sm:$0xff]
    %v74 = vld [vmem:[#allocation2 + $0x8] sm:$0xff]
    %v75 = vld [vmem:[%s2] sm:$0x1]
    %v77 = vperm.slane %v75, 0
    %v79 = vadd.f32 %v73, %v77
    %v80 = vadd.f32 %v74, %v77
    %v81 = vpack.c.bf16 %v79, %v79
    %v82 = vpack.c.bf16 %v80, %v80
    %vm83 = vcmask 781312
    %84 = vst.msk [vmem:[%s3] sm:$0xf] %vm83, %v81
    %85 = vst.msk [vmem:[%s3 + $0x4] sm:$0xf] %vm83, %v82
  $region21: #{bert_classifier_forward.13} parent=0 // pred_fallthru
    _
  // Predicated region
  $region22: #{bert_classifier_forward.13} parent=0 // pred_check
    _
  $region23: #{bert_classifier_forward.13} parent=0 // pred_check_branch
    %87 = sbr.rel (0) target = $region25
  $region24: #{bert_classifier_forward.13} parent=0 // pred_region
    _
  $region25: #{bert_classifier_forward.13} parent=0 // pred_fallthru
    _
  // Predicated region
  $region26: #{bert_classifier_forward.13} parent=0 // pred_check
    _
  $region27: #{bert_classifier_forward.13} parent=0 // pred_check_branch
    %89 = sbr.rel (0) target = $region29
  $region28: #{bert_classifier_forward.13} parent=0 // pred_region
    _
  $region29: #{bert_classifier_forward.13} parent=0 // pred_fallthru
    _

// kernel: bert_classifier_forward.15
$region0: #{bert_classifier_forward.15}
  #allocation0 [shape = 'u32[]', space=smem, size = 0x4, offset = 0x4, fixed_abs, tag = 'smem constant byte address 0x4 - core index']
  #allocation1 [shape = 'u32[72,128]{1,0:T(1,128)}', space=vmem, size = 0x9000, scoped, tag = 'internal scratch']
  #allocation2 [shape = 'f32[16,32]{1,0:T(8,128)}', space=vmem, size = 0x2000, scoped, tag = 'scratch operand']
  %s0 = inlined_call_operand.vmem [shape: bf16[16,32], index: 0, kind: input, shape index: {}]
  %s1 = inlined_call_operand.vmem [shape: bf16[32,32], index: 1, kind: input, shape index: {}]
  %s2 = inlined_call_operand.vmem [shape: f32[1,32], index: 2, kind: input, shape index: {}]
  %s3 = inlined_call_operand.vmem [shape: bf16[16,32], index: 3, kind: input, shape index: {}]
  %s4 = inlined_call_operand.vmem [shape: f32[1,32], index: 4, kind: input, shape index: {}]
  %s5 = inlined_call_operand.vmem [shape: f32[1,32], index: 5, kind: input, shape index: {}]
  %s6 = inlined_call_operand.vmem [shape: bf16[16,32], index: 6, kind: output, shape index: {}]
  %s7 = sld [smem:[#allocation0]]
  $region42: #{bert_classifier_forward.15} parent=0
    _
  %s9 = ssub.s32 1, %s7
  %s10 = scalar_select 0, %s9, %s7
  // Predicated region
  $region2: #{bert_classifier_forward.15} parent=0 // pred_check
    _
  $region3: #{bert_classifier_forward.15} parent=0 // pred_check_branch
    %12 = sbr.rel (0) target = $region5
  $region4: #{bert_classifier_forward.15} parent=0 // pred_region
    _
  $region5: #{bert_classifier_forward.15} parent=0 // pred_fallthru
    _
  // Predicated region
  $region6: #{bert_classifier_forward.15} parent=0 // pred_check
    _
  $region7: #{bert_classifier_forward.15} parent=0 // pred_check_branch
    %14 = sbr.rel (0) target = $region9
  $region8: #{bert_classifier_forward.15} parent=0 // pred_region
    _
  $region9: #{bert_classifier_forward.15} parent=0 // pred_fallthru
    _
  // Predicated region
  $region10: #{bert_classifier_forward.15} parent=0 // pred_check
    _
  $region11: #{bert_classifier_forward.15} parent=0 // pred_check_branch
    %16 = sbr.rel (0) target = $region13
  $region12: #{bert_classifier_forward.15} parent=0 // pred_region
    _
  $region13: #{bert_classifier_forward.15} parent=0 // pred_fallthru
    _
  // Predicated region
  $region14: #{bert_classifier_forward.15} parent=0 // pred_check
    _
  $region15: #{bert_classifier_forward.15} parent=0 // pred_check_branch
    %18 = sbr.rel (0) target = $region17
  $region16: #{bert_classifier_forward.15} parent=0 // pred_region
    _
  $region17: #{bert_classifier_forward.15} parent=0 // pred_fallthru
    _
  // Predicated region
  $region18: #{bert_classifier_forward.15} parent=0 // pred_check
    _
  $region19: #{bert_classifier_forward.15} parent=0 // pred_check_branch
    %20 = sbr.rel (0) target = $region21
  $region20: #{bert_classifier_forward.15} parent=0 // pred_region
    _
  $region21: #{bert_classifier_forward.15} parent=0 // pred_fallthru
    _
  // Predicated region
  $region22: #{bert_classifier_forward.15} parent=0 // pred_check
    _
  $region23: #{bert_classifier_forward.15} parent=0 // pred_check_branch
    %22 = sbr.rel (0) target = $region25
  $region24: #{bert_classifier_forward.15} parent=0 // pred_region
    _
  $region25: #{bert_classifier_forward.15} parent=0 // pred_fallthru
    _
  %p24 = scmp.eq.s32.totalorder 0, 0
  // Predicated region
  $region26: #{bert_classifier_forward.15} parent=0 // pred_check
    %p25 = pneg %p24
  $region27: #{bert_classifier_forward.15} parent=0 // pred_check_branch
    %27 = sbr.rel (%p25) target = $region29
  $region28: #{bert_classifier_forward.15} parent=0 // pred_region
    %vm28 = vcmask 261120
    %29 = vst.msk [vmem:[#allocation2] sm:$0xff] %vm28, 0.0
    %30 = vst.msk [vmem:[#allocation2 + $0x8] sm:$0xff] %vm28, 0.0
  $region29: #{bert_classifier_forward.15} parent=0 // pred_fallthru
    _
  %v31 = vld [vmem:[#allocation2] sm:$0xff]
  %v32 = vld [vmem:[#allocation2 + $0x8] sm:$0xff]
  %v33 = vld [vmem:[%s0] sm:$0xf]
  %v34 = vld [vmem:[%s0 + $0x4] sm:$0xf]
  %v35 = vld [vmem:[%s1] sm:$0xf]
  %v36 = vld [vmem:[%s1 + $0x4] sm:$0xf]
  %v37 = vld [vmem:[%s1 + $0x8] sm:$0xf]
  %v38 = vld [vmem:[%s1 + $0xc] sm:$0xf]
  %v41 = vunpack.c.l.b16 %v33
  %v42 = vunpack.c.l.b16 %v34
  %v43 = vpack.c.b16 %v42, %v41
  %v48 = vunpack.c.l.b16 %v35
  %v49 = vunpack.c.l.b16 %v36
  %v50 = vunpack.c.l.b16 %v37
  %v51 = vunpack.c.l.b16 %v38
  %v52 = vpack.c.b16 %v49, %v48
  %v53 = vpack.c.b16 %v51, %v50
  %vm56 = vcmask 261120
  %v58 = vsel %vm56, %v43, 0
  %60 = vmatpush.bf16.msra.mxu0 0
  %61 = vmatpush.bf16.msra.mxu0 0
  %62 = vmatpush.bf16.msra.mxu0 0
  %63 = vmatpush.bf16.msra.mxu0 0
  %64 = vmatpush.bf16.msra.mxu0 0
  %65 = vmatpush.bf16.msra.mxu0 0
  %66 = vmatpush.bf16.msra.mxu0 %v53
  %67 = vmatpush.bf16.msra.mxu0 %v52
  %68 = vmatmul.bf16.gmra.mxu0 %v58
  %v69 = vpop.f32.mrf.mxu0
  %v70 = vadd.f32 0.0, %v69
  %v71 = vpop.f32.mrf.mxu0
  %v72 = vadd.f32 0.0, %v71
  %73 = vdwg.mxu0
  %v74 = vadd.f32 %v31, %v70
  %v75 = vadd.f32 %v32, %v72
  %76 = vst.msk [vmem:[#allocation2] sm:$0xff] %vm56, %v74
  %77 = vst.msk [vmem:[#allocation2 + $0x8] sm:$0xff] %vm56, %v75
  // Predicated region
  $region30: #{bert_classifier_forward.15} parent=0 // pred_check
    %p78 = pneg %p24
  $region31: #{bert_classifier_forward.15} parent=0 // pred_check_branch
    %80 = sbr.rel (%p78) target = $region33
  $region32: #{bert_classifier_forward.15} parent=0 // pred_region
    %v81 = vld [vmem:[#allocation2] sm:$0xff]
    %v82 = vld [vmem:[#allocation2 + $0x8] sm:$0xff]
    %v83 = vld [vmem:[%s2] sm:$0x1]
    %v85 = vperm.slane %v83, 0
    %v87 = vadd.f32 %v81, %v85
    %v88 = vadd.f32 %v82, %v85
    %v89 = vld [vmem:[%s3] sm:$0xf]
    %v90 = vld [vmem:[%s3 + $0x4] sm:$0xf]
    %v91 = vunpack.c.l.bf16 %v89
    %v92 = vunpack.c.l.bf16 %v90
    %v93 = vadd.f32 %v87, %v91
    %v94 = vadd.f32 %v88, %v92
    %v95 = vsel %vm56, %v93, 0.0
    %96 = vadd.xlane.f32.xlu0 %v95
    %v97 = vpop.xlane.xlu0 %96
    %v98 = vsel %vm56, %v94, 0.0
    %99 = vadd.xlane.f32.xlu0 %v98
    %v100 = vpop.xlane.xlu0 %99
    %v101 = vrcp.pop 32.0
    %v102 = vmul.f32 32.0, %v101
    %v103 = vsub.f32 1.0, %v102
    %v104 = vmul.f32 %v101, %v103
    %v105 = vadd.f32 %v101, %v104
    %vm106 = vweird.f32 %v101
    %v107 = vsel %vm106, %v101, %v105
    %v108 = vmul.f32 %v97, %v107
    %v109 = vmul.f32 %v100, %v107
    %v110 = vsub.f32 %v93, %v108
    %v111 = vsub.f32 %v94, %v109
    %v112 = vmul.f32 %v110, %v110
    %v113 = vmul.f32 %v111, %v111
    %v114 = vsel %vm56, %v112, 0.0
    %115 = vadd.xlane.f32.xlu0 %v114
    %v116 = vpop.xlane.xlu0 %115
    %v117 = vsel %vm56, %v113, 0.0
    %118 = vadd.xlane.f32.xlu0 %v117
    %v119 = vpop.xlane.xlu0 %118
    %v120 = vmul.f32 %v116, %v107
    %v121 = vmul.f32 %v119, %v107
    %v122 = vadd.f32 %v120, 1e-12
    %v123 = vadd.f32 %v121, 1e-12
    %v124 = vrsqrt.pop %v122
    %v125 = vmul.f32 %v124, %v122
    %v126 = vmul.f32 %v125, %v124
    %v127 = vmul.f32 0.5, %v126
    %v128 = vsub.f32 1.5, %v127
    %v129 = vmul.f32 %v124, %v128
    %vm130 = vweird.f32 %v122
    %vm131 = vweird.f32 %v124
    %vm132 = vmor %vm130, %vm131
    %v133 = vsel %vm132, %v124, %v129
    %v134 = vrsqrt.pop %v123
    %v135 = vmul.f32 %v134, %v123
    %v136 = vmul.f32 %v135, %v134
    %v137 = vmul.f32 0.5, %v136
    %v138 = vsub.f32 1.5, %v137
    %v139 = vmul.f32 %v134, %v138
    %vm140 = vweird.f32 %v123
    %vm141 = vweird.f32 %v134
    %vm142 = vmor %vm140, %vm141
    %v143 = vsel %vm142, %v134, %v139
    %v144 = vmul.f32 %v110, %v133
    %v145 = vmul.f32 %v111, %v143
    %v146 = vld [vmem:[%s4] sm:$0x1]
    %v148 = vperm.slane %v146, 0
    %v150 = vmul.f32 %v144, %v148
    %v151 = vmul.f32 %v145, %v148
    %v152 = vld [vmem:[%s5] sm:$0x1]
    %v154 = vperm.slane %v152, 0
    %v156 = vadd.f32 %v150, %v154
    %v157 = vadd.f32 %v151, %v154
    %v158 = vpack.c.bf16 %v156, %v156
    %v159 = vpack.c.bf16 %v157, %v157
    %vm160 = vcmask 257024
    %161 = vst.msk [vmem:[%s6] sm:$0xf] %vm160, %v158
    %162 = vst.msk [vmem:[%s6 + $0x4] sm:$0xf] %vm160, %v159
  $region33: #{bert_classifier_forward.15} parent=0 // pred_fallthru
    _
  // Predicated region
  $region34: #{bert_classifier_forward.15} parent=0 // pred_check
    _
  $region35: #{bert_classifier_forward.15} parent=0 // pred_check_branch
    %164 = sbr.rel (0) target = $region37
  $region36: #{bert_classifier_forward.15} parent=0 // pred_region
    _
  $region37: #{bert_classifier_forward.15} parent=0 // pred_fallthru
    _
  // Predicated region
  $region38: #{bert_classifier_forward.15} parent=0 // pred_check
    _
  $region39: #{bert_classifier_forward.15} parent=0 // pred_check_branch
    %166 = sbr.rel (0) target = $region41
  $region40: #{bert_classifier_forward.15} parent=0 // pred_region
    _
  $region41: #{bert_classifier_forward.15} parent=0 // pred_fallthru
    _

// kernel: bert_classifier_forward.14
$region0: #{bert_classifier_forward.14}
  #allocation0 [shape = 'u32[]', space=smem, size = 0x4, offset = 0x4, fixed_abs, tag = 'smem constant byte address 0x4 - core index']
  #allocation1 [shape = 'u32[72,128]{1,0:T(1,128)}', space=vmem, size = 0x9000, scoped, tag = 'internal scratch']
  %s0 = inlined_call_operand.vmem [shape: f32[2,1,8], index: 0, kind: input, shape index: {}]
  %s1 = inlined_call_operand.vmem [shape: bf16[2,8,96], index: 1, kind: input, shape index: {}]
  %s2 = inlined_call_operand.vmem [shape: bf16[2,8,32], index: 2, kind: output, shape index: {}]
  %s3 = sld [smem:[#allocation0]]
  $region41: #{bert_classifier_forward.14} parent=0
    _
  %s5 = ssub.s32 1, %s3
  %s6 = scalar_select 0, %s5, %s3
  loop: start=0, step=1, limit=4
  $region2: #{bert_classifier_forward.14} parent=0 // loop_pre_header
    _
  $region3: #{bert_classifier_forward.14} parent=0 // loop_header
    %s8 = sphi 0, %s12
    %p9 = scmp.ge.s32.totalorder %s8, 4
    %s18 = sphi 0, %s20
    %s21 = sphi 0, %s18
    %s22 = sphi 0, %s21
    %s38 = sphi 0, %s22
    %s44 = sphi 0, %s46
    %s47 = sphi 0, %s44
    %s48 = sphi 0, %s47
    %s64 = sphi 0, %s48
    %s70 = sphi 0, %s72
    %s73 = sphi 0, %s70
    %s74 = sphi 0, %s73
    %s90 = sphi 0, %s74
  $region4: #{bert_classifier_forward.14} parent=0 // loop_header_branch
    %11 = sbr.rel (%p9) target = $region8
  $region5: #{bert_classifier_forward.14} parent=0 // loop_body
    %s13 = ssub.s32 %s8, 1
    %s14 = ssub.s32 %s8, 2
    %s15 = sadd.s32 %s8, 1
    %s16 = ssub.s32 %s8, %s15
    %p17 = scmp.eq.s32.totalorder %s16, 0
    %s19 = sadd.s32 %s18, 1
    %s20 = scalar_select %p17, %s18, %s19
    %p23 = pneg %p17
    %p24 = scmp.eq.s32.totalorder %s8, 1
    %p25 = por %p23, %p24
    %p26 = scmp.ne.s32.totalorder %s18, %s21
    %p27 = scmp.eq.s32.totalorder %s8, 0
    %p28 = por %p26, %p27
    %p29 = scmp.ne.s32.totalorder %s18, %s21
    %p30 = scmp.eq.s32.totalorder %s13, 1
    %p31 = por %p29, %p30
    %p32 = scmp.ne.s32.totalorder %s21, %s22
    %p33 = scmp.eq.s32.totalorder %s13, 0
    %p34 = por %p32, %p33
    %p35 = scmp.ne.s32.totalorder %s21, %s22
    %p36 = scmp.eq.s32.totalorder %s14, 1
    %p37 = por %p35, %p36
    %p39 = scmp.ne.s32.totalorder %s22, %s38
    %p40 = scmp.eq.s32.totalorder %s14, 0
    %p41 = por %p39, %p40
    %s42 = ssub.s32 %s8, %s15
    %p43 = scmp.eq.s32.totalorder %s42, 0
    %s45 = sadd.s32 %s44, 1
    %s46 = scalar_select %p43, %s44, %s45
    %p49 = pneg %p43
    %p50 = scmp.eq.s32.totalorder %s8, 1
    %p51 = por %p49, %p50
    %p52 = scmp.ne.s32.totalorder %s44, %s47
    %p53 = scmp.eq.s32.totalorder %s8, 0
    %p54 = por %p52, %p53
    %p55 = scmp.ne.s32.totalorder %s44, %s47
    %p56 = scmp.eq.s32.totalorder %s13, 1
    %p57 = por %p55, %p56
    %p58 = scmp.ne.s32.totalorder %s47, %s48
    %p59 = scmp.eq.s32.totalorder %s13, 0
    %p60 = por %p58, %p59
    %p61 = scmp.ne.s32.totalorder %s47, %s48
    %p62 = scmp.eq.s32.totalorder %s14, 1
    %p63 = por %p61, %p62
    %p65 = scmp.ne.s32.totalorder %s48, %s64
    %p66 = scmp.eq.s32.totalorder %s14, 0
    %p67 = por %p65, %p66
    %s68 = ssub.s32 %s8, %s15
    %p69 = scmp.eq.s32.totalorder %s68, 0
    %s71 = sadd.s32 %s70, 1
    %s72 = scalar_select %p69, %s70, %s71
    %p75 = pneg %p69
    %p76 = scmp.eq.s32.totalorder %s8, 1
    %p77 = por %p75, %p76
    %p78 = scmp.ne.s32.totalorder %s70, %s73
    %p79 = scmp.eq.s32.totalorder %s8, 0
    %p80 = por %p78, %p79
    %p81 = scmp.ne.s32.totalorder %s70, %s73
    %p82 = scmp.eq.s32.totalorder %s13, 1
    %p83 = por %p81, %p82
    %p84 = scmp.ne.s32.totalorder %s73, %s74
    %p85 = scmp.eq.s32.totalorder %s13, 0
    %p86 = por %p84, %p85
    %p87 = scmp.ne.s32.totalorder %s73, %s74
    %p88 = scmp.eq.s32.totalorder %s14, 1
    %p89 = por %p87, %p88
    %p91 = scmp.ne.s32.totalorder %s74, %s90
    %p92 = scmp.eq.s32.totalorder %s14, 0
    %p93 = por %p91, %p92
    %p94 = scmp.le.s32.totalorder 1, %s8
    %p95 = scmp.lt.s32.totalorder %s8, 3
    %p96 = pnand %p94, %p95
    %p97 = pneg %p96
    // Predicated region
    $region9: #{bert_classifier_forward.14} parent=5 // pred_check
      _
    $region10: #{bert_classifier_forward.14} parent=5 // pred_check_branch
      %99 = sbr.rel (%p96) target = $region12
    $region11: #{bert_classifier_forward.14} parent=5 // pred_region
      %s100 = ssub.s32 %s8, 1
    $region12: #{bert_classifier_forward.14} parent=5 // pred_fallthru
      _
    %p101 = scmp.lt.s32.totalorder %s8, 2
    // Predicated region
    $region13: #{bert_classifier_forward.14} parent=5 // pred_check
      %p102 = pneg %p101
    $region14: #{bert_classifier_forward.14} parent=5 // pred_check_branch
      %104 = sbr.rel (%p102) target = $region16
    $region15: #{bert_classifier_forward.14} parent=5 // pred_region
      // Predicated region
      $region17: #{bert_classifier_forward.14} parent=15 // pred_check
        %p105 = pneg %p28
      $region18: #{bert_classifier_forward.14} parent=15 // pred_check_branch
        %107 = sbr.rel (%p105) target = $region20
      $region19: #{bert_classifier_forward.14} parent=15 // pred_region
        %p108 = scmp.lt.s32.totalorder %s8, 1
        %s109 = scalar_select %p108, %s8, 1
        %s110 = scalar_lea.vmem %s0, %s109
      $region20: #{bert_classifier_forward.14} parent=15 // pred_fallthru
        _
      // Predicated region
      $region21: #{bert_classifier_forward.14} parent=15 // pred_check
        %p111 = pneg %p54
      $region22: #{bert_classifier_forward.14} parent=15 // pred_check_branch
        %113 = sbr.rel (%p111) target = $region24
      $region23: #{bert_classifier_forward.14} parent=15 // pred_region
        %p114 = scmp.lt.s32.totalorder %s8, 1
        %s115 = scalar_select %p114, %s8, 1
        %s116 = smul.addr %s115, 4
        %s117 = scalar_lea.vmem %s1, %s116
      $region24: #{bert_classifier_forward.14} parent=15 // pred_fallthru
        _
    $region16: #{bert_classifier_forward.14} parent=5 // pred_fallthru
      _
    %p118 = scmp.le.s32.totalorder 1, %s8
    %p119 = scmp.lt.s32.totalorder %s8, 3
    %p120 = pnand %p118, %p119
    %p121 = pneg %p120
    // Predicated region
    $region25: #{bert_classifier_forward.14} parent=5 // pred_check
      _
    $region26: #{bert_classifier_forward.14} parent=5 // pred_check_branch
      %123 = sbr.rel (%p120) target = $region28
    $region27: #{bert_classifier_forward.14} parent=5 // pred_region
      %s124 = ssub.s32 %s8, 1
      %p125 = scmp.lt.s32.totalorder %s13, 1
      %s126 = scalar_select %p125, %s13, 1
      %s127 = scalar_lea.vmem %s0, %s126
      %p128 = pneg %p34
      %p129 = pneg %p31
      %p130 = scmp.lt.s32.totalorder %s13, 1
      %s131 = scalar_select %p130, %s13, 1
      %s132 = smul.addr %s131, 4
      %s133 = scalar_lea.vmem %s1, %s132
      %p134 = pneg %p60
      %p135 = pneg %p57
      %p136 = pneg %p86
      %p137 = pneg %p83
      %p138 = scmp.lt.s32.totalorder %s13, 1
      %s139 = scalar_select %p138, %s13, 1
      %s140 = smul.addr %s139, 4
      %s141 = scalar_lea.vmem %s2, %s140
      %p142 = scmp.lt.s32.totalorder %s13, 1
      %s143 = scalar_select %p142, %s13, 1
      %s144 = scalar_lea.vmem %s0, %s143
      %p145 = scmp.lt.s32.totalorder %s13, 1
      %s146 = scalar_select %p145, %s13, 1
      %s147 = smul.addr %s146, 4
      %s148 = scalar_lea.vmem %s1, %s147
      %p149 = scmp.lt.s32.totalorder %s13, 1
      %s150 = scalar_select %p149, %s13, 1
      %s151 = smul.addr %s150, 4
      %s152 = scalar_lea.vmem %s2, %s151
      %v154 = vld [vmem:[%s144] sm:$0x1]
      %v155 = vld [vmem:[%s148] sm:$0xf]
      %v157 = vunpack.c.l.b16 %v155
      %v158 = vpack.c.b16 %v157, %v157
      %159 = vrot.lane.b32.xlu0 %v158, 96
      %v160 = vpop.permute.xlu0 %159
      %vm161 = vcmask 64512
      %v163 = vsel %vm161, %v155, 0
      %v166 = vsel %vm161, %v160, 0
      %168 = vmatpush.bf16.xpose.msra.mxu0 0
      %169 = vmatpush.bf16.xpose.msra.mxu0 0
      %170 = vmatpush.bf16.xpose.msra.mxu0 0
      %171 = vmatpush.bf16.xpose.msra.mxu0 0
      %172 = vmatpush.bf16.xpose.msra.mxu0 0
      %173 = vmatpush.bf16.xpose.msra.mxu0 0
      %174 = vmatpush.bf16.xpose.msra.mxu0 0
      %175 = vmatpush.bf16.xpose.msra.mxu0 %v166
      %176 = vmatmul.bf16.gmra.mxu0 %v163
      %v177 = vpop.f32.mrf.mxu0
      %v178 = vadd.f32 0.0, %v177
      %v179 = vpop.f32.mrf.mxu0
      %180 = vdwg.mxu0
      %v181 = vmul.f32 %v178, 0.35355338
      %v183 = vperm.slane %v154, 0
      %v185 = vadd.f32 %v181, %v183
      %v186 = vsel %vm161, %v185, -inf
      %187 = vmax.xlane.f32.xlu0 %v186
      %v188 = vpop.xlane.xlu0 %187
      %v189 = vsub.f32 %v185, %v188
      %v190 = vmul.f32 %v189, 1.442695
      %v191 = vpow.pop %v190
      %v192 = vsel %vm161, %v191, 0.0
      %193 = vadd.xlane.f32.xlu0 %v192
      %v194 = vpop.xlane.xlu0 %193
      %v195 = vrcp.pop %v194
      %v196 = vmul.f32 %v191, %v195
      %v197 = vpack.c.bf16 %v196, %v196
      %198 = vrot.lane.b32.xlu0 %v158, 64
      %v199 = vpop.permute.xlu0 %198
      %v201 = vsel %vm161, %v197, 0
      %vm203 = vcmask 1043456
      %v205 = vsel %vm203, %v199, 0
      %207 = vmatpush.bf16.msra.mxu0 0
      %208 = vmatpush.bf16.msra.mxu0 0
      %209 = vmatpush.bf16.msra.mxu0 0
      %210 = vmatpush.bf16.msra.mxu0 0
      %211 = vmatpush.bf16.msra.mxu0 0
      %212 = vmatpush.bf16.msra.mxu0 0
      %213 = vmatpush.bf16.msra.mxu0 0
      %214 = vmatpush.bf16.msra.mxu0 %v205
      %215 = vmatmul.bf16.gmra.mxu0 %v201
      %v216 = vpop.f32.mrf.mxu0
      %v217 = vadd.f32 0.0, %v216
      %v218 = vpop.f32.mrf.mxu0
      %219 = vdwg.mxu0
      %v220 = vpack.c.bf16 %v217, %v217
      %vm221 = vcmask 60416
      %222 = vst.msk [vmem:[%s152] sm:$0xf] %vm221, %v220
      %v223 = vld [vmem:[%s148] sm:$0xf]
      %v225 = vunpack.c.l.b16 %v223
      %v226 = vpack.c.b16 %v225, %v225
      %227 = vrot.lane.b32.xlu0 %v226, 120
      %v228 = vpop.permute.xlu0 %227
      %229 = vrot.lane.b32.xlu0 %v226, 88
      %v230 = vpop.permute.xlu0 %229
      %v232 = vsel %vm161, %v228, 0
      %v235 = vsel %vm161, %v230, 0
      %237 = vmatpush.bf16.xpose.msra.mxu0 0
      %238 = vmatpush.bf16.xpose.msra.mxu0 0
      %239 = vmatpush.bf16.xpose.msra.mxu0 0
      %240 = vmatpush.bf16.xpose.msra.mxu0 0
      %241 = vmatpush.bf16.xpose.msra.mxu0 0
      %242 = vmatpush.bf16.xpose.msra.mxu0 0
      %243 = vmatpush.bf16.xpose.msra.mxu0 0
      %244 = vmatpush.bf16.xpose.msra.mxu0 %v235
      %245 = vmatmul.bf16.gmra.mxu0 %v232
      %v246 = vpop.f32.mrf.mxu0
      %v247 = vadd.f32 0.0, %v246
      %v248 = vpop.f32.mrf.mxu0
      %249 = vdwg.mxu0
      %v250 = vmul.f32 %v247, 0.35355338
      %v251 = vadd.f32 %v250, %v183
      %v252 = vsel %vm161, %v251, -inf
      %253 = vmax.xlane.f32.xlu0 %v252
      %v254 = vpop.xlane.xlu0 %253
      %v255 = vsub.f32 %v251, %v254
      %v256 = vmul.f32 %v255, 1.442695
      %v257 = vpow.pop %v256
      %v258 = vsel %vm161, %v257, 0.0
      %259 = vadd.xlane.f32.xlu0 %v258
      %v260 = vpop.xlane.xlu0 %259
      %v261 = vrcp.pop %v260
      %v262 = vmul.f32 %v257, %v261
      %v263 = vpack.c.bf16 %v262, %v262
      %264 = vrot.lane.b32.xlu0 %v226, 56
      %v265 = vpop.permute.xlu0 %264
      %v267 = vsel %vm161, %v263, 0
      %v270 = vsel %vm203, %v265, 0
      %272 = vmatpush.bf16.msra.mxu0 0
      %273 = vmatpush.bf16.msra.mxu0 0
      %274 = vmatpush.bf16.msra.mxu0 0
      %275 = vmatpush.bf16.msra.mxu0 0
      %276 = vmatpush.bf16.msra.mxu0 0
      %277 = vmatpush.bf16.msra.mxu0 0
      %278 = vmatpush.bf16.msra.mxu0 0
      %279 = vmatpush.bf16.msra.mxu0 %v270
      %280 = vmatmul.bf16.gmra.mxu0 %v267
      %v281 = vpop.f32.mrf.mxu0
      %v282 = vadd.f32 0.0, %v281
      %v283 = vpop.f32.mrf.mxu0
      %284 = vdwg.mxu0
      %v285 = vpack.c.bf16 %v282, %v282
      %287 = vrot.lane.b32.xlu0 %v285, 8
      %v288 = vpop.permute.xlu0 %287
      %vm290 = vcmask 126016
      %291 = vst.msk [vmem:[%s152] sm:$0xf] %vm290, %v288
      %v292 = vld [vmem:[%s148] sm:$0xf]
      %v294 = vunpack.c.l.b16 %v292
      %v295 = vpack.c.b16 %v294, %v294
      %296 = vrot.lane.b32.xlu0 %v295, 112
      %v297 = vpop.permute.xlu0 %296
      %298 = vrot.lane.b32.xlu0 %v295, 80
      %v299 = vpop.permute.xlu0 %298
      %v301 = vsel %vm161, %v297, 0
      %v304 = vsel %vm161, %v299, 0
      %306 = vmatpush.bf16.xpose.msra.mxu0 0
      %307 = vmatpush.bf16.xpose.msra.mxu0 0
      %308 = vmatpush.bf16.xpose.msra.mxu0 0
      %309 = vmatpush.bf16.xpose.msra.mxu0 0
      %310 = vmatpush.bf16.xpose.msra.mxu0 0
      %311 = vmatpush.bf16.xpose.msra.mxu0 0
      %312 = vmatpush.bf16.xpose.msra.mxu0 0
      %313 = vmatpush.bf16.xpose.msra.mxu0 %v304
      %314 = vmatmul.bf16.gmra.mxu0 %v301
      %v315 = vpop.f32.mrf.mxu0
      %v316 = vadd.f32 0.0, %v315
      %v317 = vpop.f32.mrf.mxu0
      %318 = vdwg.mxu0
      %v319 = vmul.f32 %v316, 0.35355338
      %v320 = vadd.f32 %v319, %v183
      %v321 = vsel %vm161, %v320, -inf
      %322 = vmax.xlane.f32.xlu0 %v321
      %v323 = vpop.xlane.xlu0 %322
      %v324 = vsub.f32 %v320, %v323
      %v325 = vmul.f32 %v324, 1.442695
      %v326 = vpow.pop %v325
      %v327 = vsel %vm161, %v326, 0.0
      %328 = vadd.xlane.f32.xlu0 %v327
      %v329 = vpop.xlane.xlu0 %328
      %v330 = vrcp.pop %v329
      %v331 = vmul.f32 %v326, %v330
      %v332 = vpack.c.bf16 %v331, %v331
      %333 = vrot.lane.b32.xlu0 %v295, 48
      %v334 = vpop.permute.xlu0 %333
      %v336 = vsel %vm161, %v332, 0
      %v339 = vsel %vm203, %v334, 0
      %341 = vmatpush.bf16.msra.mxu0 0
      %342 = vmatpush.bf16.msra.mxu0 0
      %343 = vmatpush.bf16.msra.mxu0 0
      %344 = vmatpush.bf16.msra.mxu0 0
      %345 = vmatpush.bf16.msra.mxu0 0
      %346 = vmatpush.bf16.msra.mxu0 0
      %347 = vmatpush.bf16.msra.mxu0 0
      %348 = vmatpush.bf16.msra.mxu0 %v339
      %349 = vmatmul.bf16.gmra.mxu0 %v336
      %v350 = vpop.f32.mrf.mxu0
      %v351 = vadd.f32 0.0, %v350
      %v352 = vpop.f32.mrf.mxu0
      %353 = vdwg.mxu0
      %v354 = vpack.c.bf16 %v351, %v351
      %356 = vrot.lane.b32.xlu0 %v354, 16
      %v357 = vpop.permute.xlu0 %356
      %vm359 = vcmask 191616
      %360 = vst.msk [vmem:[%s152] sm:$0xf] %vm359, %v357
      %v361 = vld [vmem:[%s148] sm:$0xf]
      %v363 = vunpack.c.l.b16 %v361
      %v364 = vpack.c.b16 %v363, %v363
      %365 = vrot.lane.b32.xlu0 %v364, 104
      %v366 = vpop.permute.xlu0 %365
      %367 = vrot.lane.b32.xlu0 %v364, 72
      %v368 = vpop.permute.xlu0 %367
      %v370 = vsel %vm161, %v366, 0
      %v373 = vsel %vm161, %v368, 0
      %375 = vmatpush.bf16.xpose.msra.mxu0 0
      %376 = vmatpush.bf16.xpose.msra.mxu0 0
      %377 = vmatpush.bf16.xpose.msra.mxu0 0
      %378 = vmatpush.bf16.xpose.msra.mxu0 0
      %379 = vmatpush.bf16.xpose.msra.mxu0 0
      %380 = vmatpush.bf16.xpose.msra.mxu0 0
      %381 = vmatpush.bf16.xpose.msra.mxu0 0
      %382 = vmatpush.bf16.xpose.msra.mxu0 %v373
      %383 = vmatmul.bf16.gmra.mxu0 %v370
      %v384 = vpop.f32.mrf.mxu0
      %v385 = vadd.f32 0.0, %v384
      %v386 = vpop.f32.mrf.mxu0
      %387 = vdwg.mxu0
      %v388 = vmul.f32 %v385, 0.35355338
      %v389 = vadd.f32 %v388, %v183
      %v390 = vsel %vm161, %v389, -inf
      %391 = vmax.xlane.f32.xlu0 %v390
      %v392 = vpop.xlane.xlu0 %391
      %v393 = vsub.f32 %v389, %v392
      %v394 = vmul.f32 %v393, 1.442695
      %v395 = vpow.pop %v394
      %v396 = vsel %vm161, %v395, 0.0
      %397 = vadd.xlane.f32.xlu0 %v396
      %v398 = vpop.xlane.xlu0 %397
      %v399 = vrcp.pop %v398
      %v400 = vmul.f32 %v395, %v399
      %v401 = vpack.c.bf16 %v400, %v400
      %402 = vrot.lane.b32.xlu0 %v364, 40
      %v403 = vpop.permute.xlu0 %402
      %v405 = vsel %vm161, %v401, 0
      %v408 = vsel %vm203, %v403, 0
      %410 = vmatpush.bf16.msra.mxu0 0
      %411 = vmatpush.bf16.msra.mxu0 0
      %412 = vmatpush.bf16.msra.mxu0 0
      %413 = vmatpush.bf16.msra.mxu0 0
      %414 = vmatpush.bf16.msra.mxu0 0
      %415 = vmatpush.bf16.msra.mxu0 0
      %416 = vmatpush.bf16.msra.mxu0 0
      %417 = vmatpush.bf16.msra.mxu0 %v408
      %418 = vmatmul.bf16.gmra.mxu0 %v405
      %v419 = vpop.f32.mrf.mxu0
      %v420 = vadd.f32 0.0, %v419
      %v421 = vpop.f32.mrf.mxu0
      %422 = vdwg.mxu0
      %v423 = vpack.c.bf16 %v420, %v420
      %425 = vrot.lane.b32.xlu0 %v423, 24
      %v426 = vpop.permute.xlu0 %425
      %vm428 = vcmask 257216
      %429 = vst.msk [vmem:[%s152] sm:$0xf] %vm428, %v426
      %p430 = scmp.lt.s32.totalorder %s13, 1
      %s431 = scalar_select %p430, %s13, 1
      %s432 = smul.addr %s431, 4
      %s433 = scalar_lea.vmem %s2, %s432
      // Predicated region
      $region29: #{bert_classifier_forward.14} parent=27 // pred_check
        %p434 = pneg %p83
      $region30: #{bert_classifier_forward.14} parent=27 // pred_check_branch
        %436 = sbr.rel (%p434) target = $region32
      $region31: #{bert_classifier_forward.14} parent=27 // pred_region
        _
      $region32: #{bert_classifier_forward.14} parent=27 // pred_fallthru
        _
    $region28: #{bert_classifier_forward.14} parent=5 // pred_fallthru
      _
    %p437 = scmp.le.s32.totalorder 2, %s8
    // Predicated region
    $region33: #{bert_classifier_forward.14} parent=5 // pred_check
      %p438 = pneg %p437
    $region34: #{bert_classifier_forward.14} parent=5 // pred_check_branch
      %440 = sbr.rel (%p438) target = $region36
    $region35: #{bert_classifier_forward.14} parent=5 // pred_region
      %s441 = ssub.s32 %s8, 2
      // Predicated region
      $region37: #{bert_classifier_forward.14} parent=35 // pred_check
        %p442 = pneg %p89
      $region38: #{bert_classifier_forward.14} parent=35 // pred_check_branch
        %444 = sbr.rel (%p442) target = $region40
      $region39: #{bert_classifier_forward.14} parent=35 // pred_region
        %p445 = scmp.lt.s32.totalorder %s14, 1
        %s446 = scalar_select %p445, %s14, 1
        %s447 = smul.addr %s446, 4
        %s448 = scalar_lea.vmem %s2, %s447
      $region40: #{bert_classifier_forward.14} parent=35 // pred_fallthru
        _
    $region36: #{bert_classifier_forward.14} parent=5 // pred_fallthru
      _
  $region6: #{bert_classifier_forward.14} parent=0 // loop_footer
    %s12 = sadd.s32 1, %s8
  $region7: #{bert_classifier_forward.14} parent=0 // loop_footer_branch
    %7 = sbr.rel target = $region3
  $region8: #{bert_classifier_forward.14} parent=0 // loop_exit
    _

// kernel: bert_classifier_forward.17
$region0: #{bert_classifier_forward.17}
  #allocation0 [shape = 'u32[]', space=smem, size = 0x4, offset = 0x4, fixed_abs, tag = 'smem constant byte address 0x4 - core index']
  #allocation1 [shape = 'u32[72,128]{1,0:T(1,128)}', space=vmem, size = 0x9000, scoped, tag = 'internal scratch']
  #allocation2 [shape = 'f32[16,32]{1,0:T(8,128)}', space=vmem, size = 0x2000, scoped, tag = 'scratch operand']
  %s0 = inlined_call_operand.vmem [shape: bf16[16,64], index: 0, kind: input, shape index: {}]
  %s1 = inlined_call_operand.vmem [shape: bf16[64,32], index: 1, kind: input, shape index: {}]
  %s2 = inlined_call_operand.vmem [shape: f32[1,32], index: 2, kind: input, shape index: {}]
  %s3 = inlined_call_operand.vmem [shape: bf16[16,32], index: 3, kind: input, shape index: {}]
  %s4 = inlined_call_operand.vmem [shape: f32[1,32], index: 4, kind: input, shape index: {}]
  %s5 = inlined_call_operand.vmem [shape: f32[1,32], index: 5, kind: input, shape index: {}]
  %s6 = inlined_call_operand.vmem [shape: bf16[16,32], index: 6, kind: output, shape index: {}]
  %s7 = sld [smem:[#allocation0]]
  $region42: #{bert_classifier_forward.17} parent=0
    _
  %s9 = ssub.s32 1, %s7
  %s10 = scalar_select 0, %s9, %s7
  // Predicated region
  $region2: #{bert_classifier_forward.17} parent=0 // pred_check
    _
  $region3: #{bert_classifier_forward.17} parent=0 // pred_check_branch
    %12 = sbr.rel (0) target = $region5
  $region4: #{bert_classifier_forward.17} parent=0 // pred_region
    _
  $region5: #{bert_classifier_forward.17} parent=0 // pred_fallthru
    _
  // Predicated region
  $region6: #{bert_classifier_forward.17} parent=0 // pred_check
    _
  $region7: #{bert_classifier_forward.17} parent=0 // pred_check_branch
    %14 = sbr.rel (0) target = $region9
  $region8: #{bert_classifier_forward.17} parent=0 // pred_region
    _
  $region9: #{bert_classifier_forward.17} parent=0 // pred_fallthru
    _
  // Predicated region
  $region10: #{bert_classifier_forward.17} parent=0 // pred_check
    _
  $region11: #{bert_classifier_forward.17} parent=0 // pred_check_branch
    %16 = sbr.rel (0) target = $region13
  $region12: #{bert_classifier_forward.17} parent=0 // pred_region
    _
  $region13: #{bert_classifier_forward.17} parent=0 // pred_fallthru
    _
  // Predicated region
  $region14: #{bert_classifier_forward.17} parent=0 // pred_check
    _
  $region15: #{bert_classifier_forward.17} parent=0 // pred_check_branch
    %18 = sbr.rel (0) target = $region17
  $region16: #{bert_classifier_forward.17} parent=0 // pred_region
    _
  $region17: #{bert_classifier_forward.17} parent=0 // pred_fallthru
    _
  // Predicated region
  $region18: #{bert_classifier_forward.17} parent=0 // pred_check
    _
  $region19: #{bert_classifier_forward.17} parent=0 // pred_check_branch
    %20 = sbr.rel (0) target = $region21
  $region20: #{bert_classifier_forward.17} parent=0 // pred_region
    _
  $region21: #{bert_classifier_forward.17} parent=0 // pred_fallthru
    _
  // Predicated region
  $region22: #{bert_classifier_forward.17} parent=0 // pred_check
    _
  $region23: #{bert_classifier_forward.17} parent=0 // pred_check_branch
    %22 = sbr.rel (0) target = $region25
  $region24: #{bert_classifier_forward.17} parent=0 // pred_region
    _
  $region25: #{bert_classifier_forward.17} parent=0 // pred_fallthru
    _
  %p24 = scmp.eq.s32.totalorder 0, 0
  // Predicated region
  $region26: #{bert_classifier_forward.17} parent=0 // pred_check
    %p25 = pneg %p24
  $region27: #{bert_classifier_forward.17} parent=0 // pred_check_branch
    %27 = sbr.rel (%p25) target = $region29
  $region28: #{bert_classifier_forward.17} parent=0 // pred_region
    %vm28 = vcmask 261120
    %29 = vst.msk [vmem:[#allocation2] sm:$0xff] %vm28, 0.0
    %30 = vst.msk [vmem:[#allocation2 + $0x8] sm:$0xff] %vm28, 0.0
  $region29: #{bert_classifier_forward.17} parent=0 // pred_fallthru
    _
  %v31 = vld [vmem:[#allocation2] sm:$0xff]
  %v32 = vld [vmem:[#allocation2 + $0x8] sm:$0xff]
  %v33 = vld [vmem:[%s0] sm:$0xf]
  %v34 = vld [vmem:[%s0 + $0x4] sm:$0xf]
  %v35 = vld [vmem:[%s1] sm:$0xf]
  %v36 = vld [vmem:[%s1 + $0x4] sm:$0xf]
  %v37 = vld [vmem:[%s1 + $0x8] sm:$0xf]
  %v38 = vld [vmem:[%s1 + $0xc] sm:$0xf]
  %v39 = vld [vmem:[%s1 + $0x10] sm:$0xf]
  %v40 = vld [vmem:[%s1 + $0x14] sm:$0xf]
  %v41 = vld [vmem:[%s1 + $0x18] sm:$0xf]
  %v42 = vld [vmem:[%s1 + $0x1c] sm:$0xf]
  %v45 = vunpack.c.l.b16 %v33
  %v46 = vunpack.c.l.b16 %v34
  %v47 = vpack.c.b16 %v46, %v45
  %v56 = vunpack.c.l.b16 %v35
  %v57 = vunpack.c.l.b16 %v36
  %v58 = vunpack.c.l.b16 %v37
  %v59 = vunpack.c.l.b16 %v38
  %v60 = vunpack.c.l.b16 %v39
  %v61 = vunpack.c.l.b16 %v40
  %v62 = vunpack.c.l.b16 %v41
  %v63 = vunpack.c.l.b16 %v42
  %v64 = vpack.c.b16 %v57, %v56
  %v65 = vpack.c.b16 %v59, %v58
  %v66 = vpack.c.b16 %v61, %v60
  %v67 = vpack.c.b16 %v63, %v62
  %vm72 = vcmask 523264
  %v74 = vsel %vm72, %v47, 0
  %76 = vmatpush.bf16.msra.mxu0 0
  %77 = vmatpush.bf16.msra.mxu0 0
  %78 = vmatpush.bf16.msra.mxu0 0
  %79 = vmatpush.bf16.msra.mxu0 0
  %80 = vmatpush.bf16.msra.mxu0 %v67
  %81 = vmatpush.bf16.msra.mxu0 %v66
  %82 = vmatpush.bf16.msra.mxu0 %v65
  %83 = vmatpush.bf16.msra.mxu0 %v64
  %84 = vmatmul.bf16.gmra.mxu0 %v74
  %v85 = vpop.f32.mrf.mxu0
  %v86 = vadd.f32 0.0, %v85
  %v87 = vpop.f32.mrf.mxu0
  %v88 = vadd.f32 0.0, %v87
  %89 = vdwg.mxu0
  %v90 = vadd.f32 %v31, %v86
  %v91 = vadd.f32 %v32, %v88
  %vm92 = vcmask 261120
  %93 = vst.msk [vmem:[#allocation2] sm:$0xff] %vm92, %v90
  %94 = vst.msk [vmem:[#allocation2 + $0x8] sm:$0xff] %vm92, %v91
  // Predicated region
  $region30: #{bert_classifier_forward.17} parent=0 // pred_check
    %p95 = pneg %p24
  $region31: #{bert_classifier_forward.17} parent=0 // pred_check_branch
    %97 = sbr.rel (%p95) target = $region33
  $region32: #{bert_classifier_forward.17} parent=0 // pred_region
    %v98 = vld [vmem:[#allocation2] sm:$0xff]
    %v99 = vld [vmem:[#allocation2 + $0x8] sm:$0xff]
    %v100 = vld [vmem:[%s2] sm:$0x1]
    %v102 = vperm.slane %v100, 0
    %v104 = vadd.f32 %v98, %v102
    %v105 = vadd.f32 %v99, %v102
    %v106 = vld [vmem:[%s3] sm:$0xf]
    %v107 = vld [vmem:[%s3 + $0x4] sm:$0xf]
    %v108 = vunpack.c.l.bf16 %v106
    %v109 = vunpack.c.l.bf16 %v107
    %v110 = vadd.f32 %v104, %v108
    %v111 = vadd.f32 %v105, %v109
    %v112 = vsel %vm92, %v110, 0.0
    %113 = vadd.xlane.f32.xlu0 %v112
    %v114 = vpop.xlane.xlu0 %113
    %v115 = vsel %vm92, %v111, 0.0
    %116 = vadd.xlane.f32.xlu0 %v115
    %v117 = vpop.xlane.xlu0 %116
    %v118 = vrcp.pop 32.0
    %v119 = vmul.f32 32.0, %v118
    %v120 = vsub.f32 1.0, %v119
    %v121 = vmul.f32 %v118, %v120
    %v122 = vadd.f32 %v118, %v121
    %vm123 = vweird.f32 %v118
    %v124 = vsel %vm123, %v118, %v122
    %v125 = vmul.f32 %v114, %v124
    %v126 = vmul.f32 %v117, %v124
    %v127 = vsub.f32 %v110, %v125
    %v128 = vsub.f32 %v111, %v126
    %v129 = vmul.f32 %v127, %v127
    %v130 = vmul.f32 %v128, %v128
    %v131 = vsel %vm92, %v129, 0.0
    %132 = vadd.xlane.f32.xlu0 %v131
    %v133 = vpop.xlane.xlu0 %132
    %v134 = vsel %vm92, %v130, 0.0
    %135 = vadd.xlane.f32.xlu0 %v134
    %v136 = vpop.xlane.xlu0 %135
    %v137 = vmul.f32 %v133, %v124
    %v138 = vmul.f32 %v136, %v124
    %v139 = vadd.f32 %v137, 1e-12
    %v140 = vadd.f32 %v138, 1e-12
    %v141 = vrsqrt.pop %v139
    %v142 = vmul.f32 %v141, %v139
    %v143 = vmul.f32 %v142, %v141
    %v144 = vmul.f32 0.5, %v143
    %v145 = vsub.f32 1.5, %v144
    %v146 = vmul.f32 %v141, %v145
    %vm147 = vweird.f32 %v139
    %vm148 = vweird.f32 %v141
    %vm149 = vmor %vm147, %vm148
    %v150 = vsel %vm149, %v141, %v146
    %v151 = vrsqrt.pop %v140
    %v152 = vmul.f32 %v151, %v140
    %v153 = vmul.f32 %v152, %v151
    %v154 = vmul.f32 0.5, %v153
    %v155 = vsub.f32 1.5, %v154
    %v156 = vmul.f32 %v151, %v155
    %vm157 = vweird.f32 %v140
    %vm158 = vweird.f32 %v151
    %vm159 = vmor %vm157, %vm158
    %v160 = vsel %vm159, %v151, %v156
    %v161 = vmul.f32 %v127, %v150
    %v162 = vmul.f32 %v128, %v160
    %v163 = vld [vmem:[%s4] sm:$0x1]
    %v165 = vperm.slane %v163, 0
    %v167 = vmul.f32 %v161, %v165
    %v168 = vmul.f32 %v162, %v165
    %v169 = vld [vmem:[%s5] sm:$0x1]
    %v171 = vperm.slane %v169, 0
    %v173 = vadd.f32 %v167, %v171
    %v174 = vadd.f32 %v168, %v171
    %v175 = vpack.c.bf16 %v173, %v173
    %v176 = vpack.c.bf16 %v174, %v174
    %vm177 = vcmask 257024
    %178 = vst.msk [vmem:[%s6] sm:$0xf] %vm177, %v175
    %179 = vst.msk [vmem:[%s6 + $0x4] sm:$0xf] %vm177, %v176
  $region33: #{bert_classifier_forward.17} parent=0 // pred_fallthru
    _
  // Predicated region
  $region34: #{bert_classifier_forward.17} parent=0 // pred_check
    _
  $region35: #{bert_classifier_forward.17} parent=0 // pred_check_branch
    %181 = sbr.rel (0) target = $region37
  $region36: #{bert_classifier_forward.17} parent=0 // pred_region
    _
  $region37: #{bert_classifier_forward.17} parent=0 // pred_fallthru
    _
  // Predicated region
  $region38: #{bert_classifier_forward.17} parent=0 // pred_check
    _
  $region39: #{bert_classifier_forward.17} parent=0 // pred_check_branch
    %183 = sbr.rel (0) target = $region41
  $region40: #{bert_classifier_forward.17} parent=0 // pred_region
    _
  $region41: #{bert_classifier_forward.17} parent=0 // pred_fallthru
    _

// kernel: bert_classifier_forward.23
$region0: #{bert_classifier_forward.23}
  #allocation0 [shape = 'u32[]', space=smem, size = 0x4, offset = 0x4, fixed_abs, tag = 'smem constant byte address 0x4 - core index']
  #allocation1 [shape = 'u32[72,128]{1,0:T(1,128)}', space=vmem, size = 0x9000, scoped, tag = 'internal scratch']
  #allocation2 [shape = 'f32[2,32]{1,0:T(2,128)}', space=vmem, size = 0x400, scoped, tag = 'scratch operand']
  %s0 = inlined_call_operand.vmem [shape: bf16[2,32], index: 0, kind: input, shape index: {}]
  %s1 = inlined_call_operand.vmem [shape: bf16[32,32], index: 1, kind: input, shape index: {}]
  %s2 = inlined_call_operand.vmem [shape: f32[1,32], index: 2, kind: input, shape index: {}]
  %s3 = inlined_call_operand.vmem [shape: f32[2,32], index: 3, kind: output, shape index: {}]
  %s4 = sld [smem:[#allocation0]]
  $region30: #{bert_classifier_forward.23} parent=0
    _
  %s6 = ssub.s32 1, %s4
  %s7 = scalar_select 0, %s6, %s4
  // Predicated region
  $region2: #{bert_classifier_forward.23} parent=0 // pred_check
    _
  $region3: #{bert_classifier_forward.23} parent=0 // pred_check_branch
    %9 = sbr.rel (0) target = $region5
  $region4: #{bert_classifier_forward.23} parent=0 // pred_region
    _
  $region5: #{bert_classifier_forward.23} parent=0 // pred_fallthru
    _
  // Predicated region
  $region6: #{bert_classifier_forward.23} parent=0 // pred_check
    _
  $region7: #{bert_classifier_forward.23} parent=0 // pred_check_branch
    %11 = sbr.rel (0) target = $region9
  $region8: #{bert_classifier_forward.23} parent=0 // pred_region
    _
  $region9: #{bert_classifier_forward.23} parent=0 // pred_fallthru
    _
  // Predicated region
  $region10: #{bert_classifier_forward.23} parent=0 // pred_check
    _
  $region11: #{bert_classifier_forward.23} parent=0 // pred_check_branch
    %13 = sbr.rel (0) target = $region13
  $region12: #{bert_classifier_forward.23} parent=0 // pred_region
    _
  $region13: #{bert_classifier_forward.23} parent=0 // pred_fallthru
    _
  %p15 = scmp.eq.s32.totalorder 0, 0
  // Predicated region
  $region14: #{bert_classifier_forward.23} parent=0 // pred_check
    %p16 = pneg %p15
  $region15: #{bert_classifier_forward.23} parent=0 // pred_check_branch
    %18 = sbr.rel (%p16) target = $region17
  $region16: #{bert_classifier_forward.23} parent=0 // pred_region
    %vm19 = vcmask 254976
    %20 = vst.msk [vmem:[#allocation2] sm:$0x3] %vm19, 0.0
  $region17: #{bert_classifier_forward.23} parent=0 // pred_fallthru
    _
  %v21 = vld [vmem:[#allocation2] sm:$0x3]
  %v22 = vld [vmem:[%s0] sm:$0x1]
  %v23 = vld [vmem:[%s1] sm:$0xf]
  %v24 = vld [vmem:[%s1 + $0x4] sm:$0xf]
  %v25 = vld [vmem:[%s1 + $0x8] sm:$0xf]
  %v26 = vld [vmem:[%s1 + $0xc] sm:$0xf]
  %v31 = vunpack.c.l.b16 %v23
  %v32 = vunpack.c.l.b16 %v24
  %v33 = vunpack.c.l.b16 %v25
  %v34 = vunpack.c.l.b16 %v26
  %v35 = vpack.c.b16 %v32, %v31
  %v36 = vpack.c.b16 %v34, %v33
  %vm39 = vcmask 261120
  %v41 = vsel %vm39, %v22, 0
  %43 = vmatpush.bf16.msra.mxu0 0
  %44 = vmatpush.bf16.msra.mxu0 0
  %45 = vmatpush.bf16.msra.mxu0 0
  %46 = vmatpush.bf16.msra.mxu0 0
  %47 = vmatpush.bf16.msra.mxu0 0
  %48 = vmatpush.bf16.msra.mxu0 0
  %49 = vmatpush.bf16.msra.mxu0 %v36
  %50 = vmatpush.bf16.msra.mxu0 %v35
  %51 = vmatmul.bf16.gmra.mxu0 %v41
  %v52 = vpop.f32.mrf.mxu0
  %v53 = vadd.f32 0.0, %v52
  %v54 = vpop.f32.mrf.mxu0
  %55 = vdwg.mxu0
  %v56 = vadd.f32 %v21, %v53
  %vm57 = vcmask 254976
  %58 = vst.msk [vmem:[#allocation2] sm:$0x3] %vm57, %v56
  // Predicated region
  $region18: #{bert_classifier_forward.23} parent=0 // pred_check
    %p59 = pneg %p15
  $region19: #{bert_classifier_forward.23} parent=0 // pred_check_branch
    %61 = sbr.rel (%p59) target = $region21
  $region20: #{bert_classifier_forward.23} parent=0 // pred_region
    %v62 = vld [vmem:[#allocation2] sm:$0x3]
    %v63 = vld [vmem:[%s2] sm:$0x1]
    %v65 = vperm.slane %v63, 0
    %v67 = vadd.f32 %v62, %v65
    %v68 = vtanh.pop %v67
    %69 = vst.msk [vmem:[%s3] sm:$0x3] %vm57, %v68
  $region21: #{bert_classifier_forward.23} parent=0 // pred_fallthru
    _
  // Predicated region
  $region22: #{bert_classifier_forward.23} parent=0 // pred_check
    _
  $region23: #{bert_classifier_forward.23} parent=0 // pred_check_branch
    %71 = sbr.rel (0) target = $region25
  $region24: #{bert_classifier_forward.23} parent=0 // pred_region
    _
  $region25: #{bert_classifier_forward.23} parent=0 // pred_fallthru
    _
  // Predicated region
  $region26: #{bert_classifier_forward.23} parent=0 // pred_check
    _
  $region27: #{bert_classifier_forward.23} parent=0 // pred_check_branch
    %73 = sbr.rel (0) target = $region29
  $region28: #{bert_classifier_forward.23} parent=0 // pred_region
    _
  $region29: #{bert_classifier_forward.23} parent=0 // pred_fallthru
    _

// kernel: bert_classifier_forward.16
$region0: #{bert_classifier_forward.16}
  #allocation0 [shape = 'u32[]', space=smem, size = 0x4, offset = 0x4, fixed_abs, tag = 'smem constant byte address 0x4 - core index']
  #allocation1 [shape = 'u32[72,128]{1,0:T(1,128)}', space=vmem, size = 0x9000, scoped, tag = 'internal scratch']
  #allocation2 [shape = 'f32[16,64]{1,0:T(8,128)}', space=vmem, size = 0x2000, scoped, tag = 'scratch operand']
  %s0 = inlined_call_operand.vmem [shape: bf16[16,32], index: 0, kind: input, shape index: {}]
  %s1 = inlined_call_operand.vmem [shape: bf16[32,64], index: 1, kind: input, shape index: {}]
  %s2 = inlined_call_operand.vmem [shape: f32[1,64], index: 2, kind: input, shape index: {}]
  %s3 = inlined_call_operand.vmem [shape: bf16[16,64], index: 3, kind: output, shape index: {}]
  %s4 = sld [smem:[#allocation0]]
  $region30: #{bert_classifier_forward.16} parent=0
    _
  %s6 = ssub.s32 1, %s4
  %s7 = scalar_select 0, %s6, %s4
  // Predicated region
  $region2: #{bert_classifier_forward.16} parent=0 // pred_check
    _
  $region3: #{bert_classifier_forward.16} parent=0 // pred_check_branch
    %9 = sbr.rel (0) target = $region5
  $region4: #{bert_classifier_forward.16} parent=0 // pred_region
    _
  $region5: #{bert_classifier_forward.16} parent=0 // pred_fallthru
    _
  // Predicated region
  $region6: #{bert_classifier_forward.16} parent=0 // pred_check
    _
  $region7: #{bert_classifier_forward.16} parent=0 // pred_check_branch
    %11 = sbr.rel (0) target = $region9
  $region8: #{bert_classifier_forward.16} parent=0 // pred_region
    _
  $region9: #{bert_classifier_forward.16} parent=0 // pred_fallthru
    _
  // Predicated region
  $region10: #{bert_classifier_forward.16} parent=0 // pred_check
    _
  $region11: #{bert_classifier_forward.16} parent=0 // pred_check_branch
    %13 = sbr.rel (0) target = $region13
  $region12: #{bert_classifier_forward.16} parent=0 // pred_region
    _
  $region13: #{bert_classifier_forward.16} parent=0 // pred_fallthru
    _
  %p15 = scmp.eq.s32.totalorder 0, 0
  // Predicated region
  $region14: #{bert_classifier_forward.16} parent=0 // pred_check
    %p16 = pneg %p15
  $region15: #{bert_classifier_forward.16} parent=0 // pred_check_branch
    %18 = sbr.rel (%p16) target = $region17
  $region16: #{bert_classifier_forward.16} parent=0 // pred_region
    %vm19 = vcmask 523264
    %20 = vst.msk [vmem:[#allocation2] sm:$0xff] %vm19, 0.0
    %21 = vst.msk [vmem:[#allocation2 + $0x8] sm:$0xff] %vm19, 0.0
  $region17: #{bert_classifier_forward.16} parent=0 // pred_fallthru
    _
  %v22 = vld [vmem:[#allocation2] sm:$0xff]
  %v23 = vld [vmem:[#allocation2 + $0x8] sm:$0xff]
  %v24 = vld [vmem:[%s0] sm:$0xf]
  %v25 = vld [vmem:[%s0 + $0x4] sm:$0xf]
  %v26 = vld [vmem:[%s1] sm:$0xf]
  %v27 = vld [vmem:[%s1 + $0x4] sm:$0xf]
  %v28 = vld [vmem:[%s1 + $0x8] sm:$0xf]
  %v29 = vld [vmem:[%s1 + $0xc] sm:$0xf]
  %v32 = vunpack.c.l.b16 %v24
  %v33 = vunpack.c.l.b16 %v25
  %v34 = vpack.c.b16 %v33, %v32
  %v39 = vunpack.c.l.b16 %v26
  %v40 = vunpack.c.l.b16 %v27
  %v41 = vunpack.c.l.b16 %v28
  %v42 = vunpack.c.l.b16 %v29
  %v43 = vpack.c.b16 %v40, %v39
  %v44 = vpack.c.b16 %v42, %v41
  %vm47 = vcmask 261120
  %v49 = vsel %vm47, %v34, 0
  %51 = vmatpush.bf16.msra.mxu0 0
  %52 = vmatpush.bf16.msra.mxu0 0
  %53 = vmatpush.bf16.msra.mxu0 0
  %54 = vmatpush.bf16.msra.mxu0 0
  %55 = vmatpush.bf16.msra.mxu0 0
  %56 = vmatpush.bf16.msra.mxu0 0
  %57 = vmatpush.bf16.msra.mxu0 %v44
  %58 = vmatpush.bf16.msra.mxu0 %v43
  %59 = vmatmul.bf16.gmra.mxu0 %v49
  %v60 = vpop.f32.mrf.mxu0
  %v61 = vadd.f32 0.0, %v60
  %v62 = vpop.f32.mrf.mxu0
  %v63 = vadd.f32 0.0, %v62
  %64 = vdwg.mxu0
  %v65 = vadd.f32 %v22, %v61
  %v66 = vadd.f32 %v23, %v63
  %vm67 = vcmask 523264
  %68 = vst.msk [vmem:[#allocation2] sm:$0xff] %vm67, %v65
  %69 = vst.msk [vmem:[#allocation2 + $0x8] sm:$0xff] %vm67, %v66
  // Predicated region
  $region18: #{bert_classifier_forward.16} parent=0 // pred_check
    %p70 = pneg %p15
  $region19: #{bert_classifier_forward.16} parent=0 // pred_check_branch
    %72 = sbr.rel (%p70) target = $region21
  $region20: #{bert_classifier_forward.16} parent=0 // pred_region
    %v73 = vld [vmem:[#allocation2] sm:$0xff]
    %v74 = vld [vmem:[#allocation2 + $0x8] sm:$0xff]
    %v75 = vld [vmem:[%s2] sm:$0x1]
    %v77 = vperm.slane %v75, 0
    %v79 = vadd.f32 %v73, %v77
    %v80 = vadd.f32 %v74, %v77
    %v81 = vmul.f32 %v79, 0.5
    %v82 = vmul.f32 %v80, 0.5
    %v83 = vmul.f32 %v79, 0.70710677
    %v84 = vmul.f32 %v80, 0.70710677
    %v85 = vand.u32 2147483647, %v83
    %v86 = vand.u32 2147483647, %v84
    %v87 = vmul.f32 %v85, 0.3275911
    %v88 = vmul.f32 %v86, 0.3275911
    %v89 = vadd.f32 %v87, 1.0
    %v90 = vadd.f32 %v88, 1.0
    %v91 = vrcp.pop %v89
    %v92 = vmul.f32 %v89, %v91
    %v93 = vsub.f32 1.0, %v92
    %v94 = vmul.f32 %v91, %v93
    %v95 = vadd.f32 %v91, %v94
    %vm96 = vweird.f32 %v89
    %vm97 = vweird.f32 %v91
    %vm98 = vmor %vm96, %vm97
    %v99 = vsel %vm98, %v91, %v95
    %v100 = vand.u32 2147483647, %v89
    %vm101 = vcmp.eq.f32.partialorder %v100, 8.507059e+37
    %v102 = vand.u32 %v89, 2147483648
    %v103 = vor.u32 1.1754944e-38, %v102
    %v104 = vsel %vm101, %v103, %v99
    %v105 = vmul.f32 1.0, %v104
    %v106 = vrcp.pop %v90
    %v107 = vmul.f32 %v90, %v106
    %v108 = vsub.f32 1.0, %v107
    %v109 = vmul.f32 %v106, %v108
    %v110 = vadd.f32 %v106, %v109
    %vm111 = vweird.f32 %v90
    %vm112 = vweird.f32 %v106
    %vm113 = vmor %vm111, %vm112
    %v114 = vsel %vm113, %v106, %v110
    %v115 = vand.u32 2147483647, %v90
    %vm116 = vcmp.eq.f32.partialorder %v115, 8.507059e+37
    %v117 = vand.u32 %v90, 2147483648
    %v118 = vor.u32 1.1754944e-38, %v117
    %v119 = vsel %vm116, %v118, %v114
    %v120 = vmul.f32 1.0, %v119
    %v121 = vmul.f32 %v105, 1.0614054
    %v122 = vmul.f32 %v120, 1.0614054
    %v123 = vadd.f32 %v121, -1.4531521
    %v124 = vadd.f32 %v122, -1.4531521
    %v125 = vmul.f32 %v105, %v123
    %v126 = vmul.f32 %v120, %v124
    %v127 = vadd.f32 %v125, 1.4214138
    %v128 = vadd.f32 %v126, 1.4214138
    %v129 = vmul.f32 %v105, %v127
    %v130 = vmul.f32 %v120, %v128
    %v131 = vadd.f32 %v129, -0.28449672
    %v132 = vadd.f32 %v130, -0.28449672
    %v133 = vmul.f32 %v105, %v131
    %v134 = vmul.f32 %v120, %v132
    %v135 = vadd.f32 %v133, 0.2548296
    %v136 = vadd.f32 %v134, 0.2548296
    %v137 = vmul.f32 %v105, %v135
    %v138 = vmul.f32 %v120, %v136
    %v139 = vsub.f32 0.0, %v85
    %v140 = vsub.f32 0.0, %v86
    %v141 = vmul.f32 %v139, %v85
    %v142 = vmul.f32 %v140, %v86
    %v143 = vmul.f32 %v141, 1.442695
    %v144 = vpow.pop %v143
    %v145 = vmul.f32 %v142, 1.442695
    %v146 = vpow.pop %v145
    %v147 = vmul.f32 %v137, %v144
    %v148 = vmul.f32 %v138, %v146
    %v149 = vsub.f32 1.0, %v147
    %v150 = vsub.f32 1.0, %v148
    %vm151 = vcmp.lt.f32.partialorder %v83, 0.0
    %vm152 = vcmp.lt.f32.partialorder %v84, 0.0
    %v153 = vsub.f32 0.0, %v149
    %v154 = vsub.f32 0.0, %v150
    %v155 = vsel %vm151, %v153, %v149
    %v156 = vsel %vm152, %v154, %v150
    %v157 = vadd.f32 %v155, 1.0
    %v158 = vadd.f32 %v156, 1.0
    %v159 = vmul.f32 %v81, %v157
    %v160 = vmul.f32 %v82, %v158
    %v161 = vpack.c.bf16 %v159, %v159
    %v162 = vpack.c.bf16 %v160, %v160
    %vm163 = vcmask 519168
    %164 = vst.msk [vmem:[%s3] sm:$0xf] %vm163, %v161
    %165 = vst.msk [vmem:[%s3 + $0x4] sm:$0xf] %vm163, %v162
  $region21: #{bert_classifier_forward.16} parent=0 // pred_fallthru
    _
  // Predicated region
  $region22: #{bert_classifier_forward.16} parent=0 // pred_check
    _
  $region23: #{bert_classifier_forward.16} parent=0 // pred_check_branch
    %167 = sbr.rel (0) target = $region25
  $region24: #{bert_classifier_forward.16} parent=0 // pred_region
    _
  $region25: #{bert_classifier_forward.16} parent=0 // pred_fallthru
    _
  // Predicated region
  $region26: #{bert_classifier_forward.16} parent=0 // pred_check
    _
  $region27: #{bert_classifier_forward.16} parent=0 // pred_check_branch
    %169 = sbr.rel (0) target = $region29
  $region28: #{bert_classifier_forward.16} parent=0 // pred_region
    _
  $region29: #{bert_classifier_forward.16} parent=0 // pred_fallthru
    _

</llo_original>
